<compile_context>
chip_gen: v5e
topology: v5e:2x2
jax: 0.10.0
libtpu: 0.0.40
codegen_flags: <defaults>
</compile_context>

<pallas_src>
import functools

import jax
import jax.numpy as jnp
from jax.experimental import pallas as pl
from jax.experimental.pallas import tpu as pltpu

LRELU_SLOPE = 0.1


def _resblock_kernel(body_ref, edges_ref, w1_ref, b1_ref, w2_ref, b2_ref,
                     out_ref, xwin_ref, *, K, dilations, TT, T_true, op_dtype):
    """All three LReLU-DConv-LReLU-Conv(+residual) stages on one (C, TT) tile.

    body_ref  : (C, TT)        auto-pipelined interior of the time tile
    edges_ref : (C, 2*H)       [left halo | right halo] columns for this tile
    w1_ref    : (S, K, C, C)   dilated-conv taps per stage (VMEM resident)
    b1_ref    : (S, C, 1)      f32 biases
    w2_ref    : (S, K, C, C)   conv2 (dilation=1) taps per stage
    b2_ref    : (S, C, 1)
    out_ref   : (C, TT)
    xwin_ref  : (C, TT + 2*H)  f32 scratch: assembled halo'd window
    """
    j = pl.program_id(1)
    f32 = jnp.float32
    pads = [(d * (K - 1) // 2, (K - 1) // 2) for d in dilations]
    H = sum(p1 + p2 for p1, p2 in pads)

    # Assemble the halo'd window in VMEM (the edge slabs are only 2*H columns,
    # so this is cheap; everything downstream works on contiguous time).
    xwin_ref[:, :H] = edges_ref[:, :H].astype(f32)
    xwin_ref[:, H:H + TT] = body_ref[...].astype(f32)
    xwin_ref[:, H + TT:] = edges_ref[:, H:].astype(f32)
    cur = xwin_ref[...]                               # (C, TT + 2H), f32

    h_rem = H
    for s, d1 in enumerate(dilations):                # static S=3 stage loop
        p1, p2 = pads[s]
        w_in = TT + 2 * h_rem                         # stage input width
        wt = w_in - 2 * p1                            # conv1 output width
        w_out = wt - 2 * p2                           # conv2 / stage-out width

        # LReLU #1 (VPU), cast to the MXU operand dtype (bf16 on v6e/v7x).
        xw = jnp.where(cur >= 0, cur, LRELU_SLOPE * cur).astype(op_dtype)

        # conv1: dilated 'same' Conv1d, K taps accumulated in f32 on the MXU.
        acc1 = jnp.dot(w1_ref[s, 0], xw[:, :wt], preferred_element_type=f32)
        for k in range(1, K):
            acc1 = acc1 + jnp.dot(w1_ref[s, k], xw[:, k * d1:k * d1 + wt],
                                  preferred_element_type=f32)
        acc1 = acc1 + b1_ref[s]

        # Zero conv1 outputs outside the valid [0, T) range so conv2 (and the
        # next stage) see the same zero padding as the unfused reference.
        # TODO(synk): gate these masks with pl.when on edge tiles only.
        pos1 = (j * TT - (h_rem - p1)
                + jax.lax.broadcasted_iota(jnp.int32, (1, wt), 1))
        acc1 = jnp.where((pos1 >= 0) & (pos1 < T_true), acc1, 0.0)

        xt = jnp.where(acc1 >= 0, acc1, LRELU_SLOPE * acc1).astype(op_dtype)

        # conv2 (dilation=1) + bias + residual (from the same f32 window).
        hp = p1 + p2
        acc2 = cur[:, hp:hp + w_out] + b2_ref[s]
        for k in range(K):
            acc2 = acc2 + jnp.dot(w2_ref[s, k], xt[:, k:k + w_out],
                                  preferred_element_type=f32)

        h_rem = h_rem - hp
        pos2 = (j * TT - h_rem
                + jax.lax.broadcasted_iota(jnp.int32, (1, w_out), 1))
        cur = jnp.where((pos2 >= 0) & (pos2 < T_true), acc2, 0.0)

    out_ref[...] = cur.astype(out_ref.dtype)          # h_rem == 0, width == TT


def resblock_forward(x, params, dilation, *, time_tile=1024, mxu_dtype=None,
                     vmem_limit_bytes=48 * 1024 * 1024,
                     single_buffer_weights=False):
    """x: (B, C, T) -> (B, C, T). One fused pallas_call per ResBlock."""
    B, C, T = x.shape
    convs1, convs2 = params["convs1"], params["convs2"]
    S = len(dilation)
    assert len(convs1) == S and len(convs2) == S
    K = convs1[0][0].shape[-1]
    pads = [(d * (K - 1) // 2, (K - 1) // 2) for d in dilation]
    H = sum(p1 + p2 for p1, p2 in pads)

    # Time tile: whole T when small, otherwise a multiple of 128 (lane-dense
    # output stores).  Default 1024 keeps the working set within v7x's 64 MiB
    # VMEM; v5e/v6e (128 MiB) can use 2048-4096.
    TT = T if T <= time_tile else max(128, (time_tile // 128) * 128)
    assert TT >= H, f"time tile {TT} must cover the total conv halo {H}"
    nT = pl.cdiv(T, TT)
    Tfull = nT * TT

    # Interior tiles (auto-pipelined).  Only the tail is padded for tile
    # round-up; 'same' zero padding / halos come from the tiny edge stream.
    x_body = x if Tfull == T else jnp.pad(x, ((0, 0), (0, 0), (0, Tfull - T)))

    # Halo columns per tile: left = last H cols of the previous tile, right =
    # first H cols of the next tile, zeros at the sequence ends.  (B,nT,C,2H)
    # is tiny and auto-pipelined too -> no serialized manual DMA and no
    # per-stage full-activation jnp.pad.
    xr = x_body.reshape(B, C, nT, TT)
    zed = jnp.zeros((B, C, 1, H), x.dtype)
    lefts = jnp.concatenate([zed, xr[:, :, :-1, TT - H:]], axis=2)
    rights = jnp.concatenate([xr[:, :, 1:, :H], zed], axis=2)
    x_edges = jnp.transpose(jnp.concatenate([lefts, rights], axis=-1),
                            (0, 2, 1, 3))                      # (B, nT, C, 2H)

    # Weights stacked per stage, tap-major (S, K, C_out, C_in); cast host-side
    # to the MXU operand dtype (bf16 recommended on v6e/v7x) so HBM/VMEM halve.
    op_dtype = jnp.dtype(mxu_dtype) if mxu_dtype is not None else x.dtype
    w1_all = jnp.stack([jnp.transpose(w, (2, 0, 1)) for w, _ in convs1]).astype(op_dtype)
    w2_all = jnp.stack([jnp.transpose(w, (2, 0, 1)) for w, _ in convs2]).astype(op_dtype)
    b1_all = jnp.stack([b.reshape(C, 1) for _, b in convs1]).astype(jnp.float32)
    b2_all = jnp.stack([b.reshape(C, 1) for _, b in convs2]).astype(jnp.float32)

    wspec_kwargs = {}
    if single_buffer_weights:   # v7x: halve resident weight VMEM (constant idx map)
        wspec_kwargs["pipeline_mode"] = pl.Buffered(1)

    kernel = functools.partial(_resblock_kernel, K=K, dilations=tuple(dilation),
                               TT=TT, T_true=T, op_dtype=op_dtype)
    out = pl.pallas_call(
        kernel,
        out_shape=jax.ShapeDtypeStruct((B, C, Tfull), x.dtype),
        grid=(B, nT),
        in_specs=[
            pl.BlockSpec((None, C, TT), lambda b, j: (b, 0, j)),              # body
            pl.BlockSpec((None, None, C, 2 * H), lambda b, j: (b, j, 0, 0)),  # halos
            pl.BlockSpec((S, K, C, C), lambda b, j: (0, 0, 0, 0), **wspec_kwargs),
            pl.BlockSpec((S, C, 1), lambda b, j: (0, 0, 0), **wspec_kwargs),
            pl.BlockSpec((S, K, C, C), lambda b, j: (0, 0, 0, 0), **wspec_kwargs),
            pl.BlockSpec((S, C, 1), lambda b, j: (0, 0, 0), **wspec_kwargs),
        ],
        out_specs=pl.BlockSpec((None, C, TT), lambda b, j: (b, 0, j)),
        scratch_shapes=[pltpu.VMEM((C, TT + 2 * H), jnp.float32)],
        compiler_params=pltpu.CompilerParams(
            dimension_semantics=("parallel", "parallel"),
            vmem_limit_bytes=vmem_limit_bytes,
        ),
    )(x_body, x_edges, w1_all, b1_all, w2_all, b2_all)
    return out if Tfull == T else out[:, :, :T]


def init_resblock_params(key, channels, kernel_size):
    """Weights ~ N(0, 0.01) mirroring init_weights; weight_norm at init leaves
    the effective weight equal to the raw weight, so raw weights are used."""
    params = {"convs1": [], "convs2": []}
    keys = jax.random.split(key, 12)
    idx = 0
    for name in ("convs1", "convs2"):
        for _ in range(3):
            w = 0.01 * jax.random.normal(
                keys[idx], (channels, channels, kernel_size), jnp.float32)
            b = 0.01 * jax.random.normal(keys[idx + 1], (channels,), jnp.float32)
            params[name].append((w, b))
            idx += 2
    return params


# ----------------------- pure-JAX reference for checking -----------------------
def _ref_conv1d_same(x, w, b, d):
    pad = d * (w.shape[-1] - 1) // 2
    y = jax.lax.conv_general_dilated(
        x, w, window_strides=(1,), padding=[(pad, pad)], rhs_dilation=(d,),
        dimension_numbers=("NCH", "OIH", "NCH"))
    return y + b[None, :, None]


def resblock_ref(x, params, dilation):
    for (w1, b1), (w2, b2), d in zip(params["convs1"], params["convs2"], dilation):
        xt = jnp.where(x >= 0, x, LRELU_SLOPE * x)
        xt = _ref_conv1d_same(xt, w1, b1, d)
        xt = jnp.where(xt >= 0, xt, LRELU_SLOPE * xt)
        xt = _ref_conv1d_same(xt, w2, b2, 1)
        x = xt + x
    return x


if __name__ == "__main__":
    B, C, T = 2, 4, 256
    kernel_size = 3
    dilation = (1, 3, 5)

    key = jax.random.PRNGKey(0)
    kx, kp = jax.random.split(key)
    x = jax.random.normal(kx, (B, C, T), jnp.float32)
    params = init_resblock_params(kp, C, kernel_size)

    ref = resblock_ref(x, params, dilation)

    # Multi-tile path (TT=128 -> 2 time tiles per batch element, exercises halos).
    fwd = jax.jit(functools.partial(resblock_forward, dilation=dilation, time_tile=128))
    out = jax.block_until_ready(fwd(x, params))
    assert out.shape == (B, C, T)
    assert jnp.allclose(out, ref, atol=1e-5, rtol=1e-5), "tiled path mismatch"

    # Single-tile (whole-T) path.
    out2 = jax.block_until_ready(resblock_forward(x, params, dilation, time_tile=512))
    assert jnp.allclose(out2, ref, atol=1e-5, rtol=1e-5), "single-tile path mismatch"

    # Ragged T (tail tile masked in-kernel, then sliced).
    T3 = 200
    x3 = x[:, :, :T3]
    ref3 = resblock_ref(x3, params, dilation)
    out3 = jax.block_until_ready(resblock_forward(x3, params, dilation, time_tile=128))
    assert out3.shape == (B, C, T3)
    assert jnp.allclose(out3, ref3, atol=1e-5, rtol=1e-5), "ragged-T path mismatch"

    # bf16 MXU operands (v6e/v7x fast path) -> looser tolerance expected.
    out_bf = jax.block_until_ready(
        resblock_forward(x, params, dilation, time_tile=128, mxu_dtype=jnp.bfloat16))
    assert jnp.allclose(out_bf, ref, atol=1e-2, rtol=1e-2), "bf16 MXU path mismatch"

    print("KERNEL_OK")
</pallas_src>

<mosaic_0001>
module attributes {stable_mosaic.version = 11 : i64} {
  func.func @_resblock_kernel(%arg0: i32, %arg1: i32, %arg2: memref<1x4x128xf32, #tpu.memory_space<vmem>>, %arg3: memref<1x1x4x24xf32, #tpu.memory_space<vmem>>, %arg4: memref<3x3x4x4xf32, #tpu.memory_space<vmem>>, %arg5: memref<3x4x1xf32, #tpu.memory_space<vmem>>, %arg6: memref<3x3x4x4xf32, #tpu.memory_space<vmem>>, %arg7: memref<3x4x1xf32, #tpu.memory_space<vmem>>, %arg8: memref<1x4x128xf32, #tpu.memory_space<vmem>>, %arg9: memref<4x152xf32, #tpu.memory_space<vmem>>) attributes {dimension_semantics = [#tpu.dimension_semantics<parallel>, #tpu.dimension_semantics<parallel>], iteration_bounds = array<i64: 2, 2>, scalar_prefetch = 0 : i64, scratch_operands = 1 : i64, tpu.core_type = #tpu.core_type<tc>, window_params = [{transform_indices = @transform_0, window_bounds = array<i64: 1, 4, 128>}, {transform_indices = @transform_1, window_bounds = array<i64: 1, 1, 4, 24>}, {pipeline_mode = #tpu.pipeline_mode<synchronous>, transform_indices = @transform_2, window_bounds = array<i64: 3, 3, 4, 4>}, {pipeline_mode = #tpu.pipeline_mode<synchronous>, transform_indices = @transform_3, window_bounds = array<i64: 3, 4, 1>}, {pipeline_mode = #tpu.pipeline_mode<synchronous>, transform_indices = @transform_4, window_bounds = array<i64: 3, 3, 4, 4>}, {pipeline_mode = #tpu.pipeline_mode<synchronous>, transform_indices = @transform_5, window_bounds = array<i64: 3, 4, 1>}, {transform_indices = @transform_6, window_bounds = array<i64: 1, 4, 128>}]} {
    %c0 = arith.constant 0 : index
    %c0_0 = arith.constant 0 : index
    %c0_1 = arith.constant 0 : index
    %c0_2 = arith.constant 0 : index
    %0 = vector.load %arg3[%c0, %c0_0, %c0_1, %c0_2] : memref<1x1x4x24xf32, #tpu.memory_space<vmem>>, vector<1x1x4x12xf32>
    %1 = vector.shape_cast %0 : vector<1x1x4x12xf32> to vector<4x12xf32>
    %c0_3 = arith.constant 0 : index
    %c0_4 = arith.constant 0 : index
    %2 = vector.load %arg9[%c0_3, %c0_4] : memref<4x152xf32, #tpu.memory_space<vmem>>, vector<4x12xf32>
    tpu.vector_store %arg9[%c0_3, %c0_4], %1 {strides = array<i32>} : memref<4x152xf32, #tpu.memory_space<vmem>>, vector<4x12xf32>,
    %c0_5 = arith.constant 0 : index
    %c0_6 = arith.constant 0 : index
    %c0_7 = arith.constant 0 : index
    %3 = vector.load %arg2[%c0_5, %c0_6, %c0_7] : memref<1x4x128xf32, #tpu.memory_space<vmem>>, vector<1x4x128xf32>
    %4 = vector.shape_cast %3 : vector<1x4x128xf32> to vector<4x128xf32>
    %c0_8 = arith.constant 0 : index
    %c12 = arith.constant 12 : index
    %5 = vector.load %arg9[%c0_8, %c12] : memref<4x152xf32, #tpu.memory_space<vmem>>, vector<4x128xf32>
    tpu.vector_store %arg9[%c0_8, %c12], %4 {strides = array<i32>} : memref<4x152xf32, #tpu.memory_space<vmem>>, vector<4x128xf32>,
    %c0_9 = arith.constant 0 : index
    %c0_10 = arith.constant 0 : index
    %c0_11 = arith.constant 0 : index
    %c12_12 = arith.constant 12 : index
    %6 = vector.load %arg3[%c0_9, %c0_10, %c0_11, %c12_12] : memref<1x1x4x24xf32, #tpu.memory_space<vmem>>, vector<1x1x4x12xf32>
    %7 = vector.shape_cast %6 : vector<1x1x4x12xf32> to vector<4x12xf32>
    %c0_13 = arith.constant 0 : index
    %c140 = arith.constant 140 : index
    %8 = vector.load %arg9[%c0_13, %c140] : memref<4x152xf32, #tpu.memory_space<vmem>>, vector<4x12xf32>
    tpu.vector_store %arg9[%c0_13, %c140], %7 {strides = array<i32>} : memref<4x152xf32, #tpu.memory_space<vmem>>, vector<4x12xf32>,
    %c0_14 = arith.constant 0 : index
    %c0_15 = arith.constant 0 : index
    %9 = vector.load %arg9[%c0_14, %c0_15] : memref<4x152xf32, #tpu.memory_space<vmem>>, vector<4x152xf32>
    %cst = arith.constant 0.000000e+00 : f32
    %10 = vector.broadcast %cst : f32 to vector<4x152xf32>
    %11 = arith.cmpf oge, %9, %10 : vector<4x152xf32>
    %cst_16 = arith.constant 1.000000e-01 : f32
    %12 = vector.broadcast %cst_16 : f32 to vector<4x152xf32>
    %13 = arith.mulf %12, %9 : vector<4x152xf32>
    %14 = arith.select %11, %9, %13 : vector<4x152xi1>, vector<4x152xf32>
    %c0_17 = arith.constant 0 : index
    %c0_18 = arith.constant 0 : index
    %c0_19 = arith.constant 0 : index
    %c0_20 = arith.constant 0 : index
    %15 = vector.load %arg4[%c0_17, %c0_18, %c0_19, %c0_20] : memref<3x3x4x4xf32, #tpu.memory_space<vmem>>, vector<1x1x4x4xf32>
    %16 = vector.shape_cast %15 : vector<1x1x4x4xf32> to vector<4x4xf32>
    %17 = vector.extract_strided_slice %14 {offsets = [0, 0], sizes = [4, 150], strides = [1, 1]} : vector<4x152xf32> to vector<4x150xf32>
    %cst_21 = arith.constant dense<0.000000e+00> : vector<4x150xf32>
    %18 = tpu.matmul %16, %17, %cst_21 {dimension_numbers = #tpu.dot_dimension_numbers<[1], [0], [0], [1], [0, 0, 1, 1], [], []>} : vector<4x4xf32>, vector<4x150xf32>, vector<4x150xf32> -> vector<4x150xf32>
    %c0_22 = arith.constant 0 : index
    %c1 = arith.constant 1 : index
    %c0_23 = arith.constant 0 : index
    %c0_24 = arith.constant 0 : index
    %19 = vector.load %arg4[%c0_22, %c1, %c0_23, %c0_24] : memref<3x3x4x4xf32, #tpu.memory_space<vmem>>, vector<1x1x4x4xf32>
    %20 = vector.shape_cast %19 : vector<1x1x4x4xf32> to vector<4x4xf32>
    %21 = vector.extract_strided_slice %14 {offsets = [0, 1], sizes = [4, 150], strides = [1, 1]} : vector<4x152xf32> to vector<4x150xf32>
    %cst_25 = arith.constant dense<0.000000e+00> : vector<4x150xf32>
    %22 = tpu.matmul %20, %21, %cst_25 {dimension_numbers = #tpu.dot_dimension_numbers<[1], [0], [0], [1], [0, 0, 1, 1], [], []>} : vector<4x4xf32>, vector<4x150xf32>, vector<4x150xf32> -> vector<4x150xf32>
    %23 = arith.addf %18, %22 : vector<4x150xf32>
    %c0_26 = arith.constant 0 : index
    %c2 = arith.constant 2 : index
    %c0_27 = arith.constant 0 : index
    %c0_28 = arith.constant 0 : index
    %24 = vector.load %arg4[%c0_26, %c2, %c0_27, %c0_28] : memref<3x3x4x4xf32, #tpu.memory_space<vmem>>, vector<1x1x4x4xf32>
    %25 = vector.shape_cast %24 : vector<1x1x4x4xf32> to vector<4x4xf32>
    %26 = vector.extract_strided_slice %14 {offsets = [0, 2], sizes = [4, 150], strides = [1, 1]} : vector<4x152xf32> to vector<4x150xf32>
    %cst_29 = arith.constant dense<0.000000e+00> : vector<4x150xf32>
    %27 = tpu.matmul %25, %26, %cst_29 {dimension_numbers = #tpu.dot_dimension_numbers<[1], [0], [0], [1], [0, 0, 1, 1], [], []>} : vector<4x4xf32>, vector<4x150xf32>, vector<4x150xf32> -> vector<4x150xf32>
    %28 = arith.addf %23, %27 : vector<4x150xf32>
    %c0_30 = arith.constant 0 : index
    %c0_31 = arith.constant 0 : index
    %c0_32 = arith.constant 0 : index
    %29 = vector.load %arg5[%c0_30, %c0_31, %c0_32] : memref<3x4x1xf32, #tpu.memory_space<vmem>>, vector<1x4x1xf32>
    %30 = vector.shape_cast %29 : vector<1x4x1xf32> to vector<4x1xf32>
    %31 = vector.broadcast %30 : vector<4x1xf32> to vector<4x150xf32>
    %32 = arith.addf %28, %31 : vector<4x150xf32>
    %c128_i32 = arith.constant 128 : i32
    %33 = arith.muli %arg1, %c128_i32 : i32
    %c11_i32 = arith.constant 11 : i32
    %34 = arith.subi %33, %c11_i32 : i32
    %35 = tpu.iota {dimensions = array<i32: 1>} : vector<1x150xi32>
    %36 = vector.broadcast %34 : i32 to vector<1x150xi32>
    %37 = arith.addi %36, %35 : vector<1x150xi32>
    %c0_i32 = arith.constant 0 : i32
    %38 = vector.broadcast %c0_i32 : i32 to vector<1x150xi32>
    %39 = arith.cmpi sge, %37, %38 : vector<1x150xi32>
    %c256_i32 = arith.constant 256 : i32
    %40 = vector.broadcast %c256_i32 : i32 to vector<1x150xi32>
    %41 = arith.cmpi slt, %37, %40 : vector<1x150xi32>
    %42 = arith.andi %39, %41 : vector<1x150xi1>
    %cst_33 = arith.constant 0.000000e+00 : f32
    %43 = vector.shape_cast %42 : vector<1x150xi1> to vector<1x150xi1>
    %44 = vector.broadcast %43 : vector<1x150xi1> to vector<4x150xi1>
    %45 = vector.broadcast %cst_33 : f32 to vector<4x150xf32>
    %46 = arith.select %44, %32, %45 : vector<4x150xi1>, vector<4x150xf32>
    %cst_34 = arith.constant 0.000000e+00 : f32
    %47 = vector.broadcast %cst_34 : f32 to vector<4x150xf32>
    %48 = arith.cmpf oge, %46, %47 : vector<4x150xf32>
    %cst_35 = arith.constant 1.000000e-01 : f32
    %49 = vector.broadcast %cst_35 : f32 to vector<4x150xf32>
    %50 = arith.mulf %49, %46 : vector<4x150xf32>
    %51 = arith.select %48, %46, %50 : vector<4x150xi1>, vector<4x150xf32>
    %52 = vector.extract_strided_slice %9 {offsets = [0, 2], sizes = [4, 148], strides = [1, 1]} : vector<4x152xf32> to vector<4x148xf32>
    %c0_36 = arith.constant 0 : index
    %c0_37 = arith.constant 0 : index
    %c0_38 = arith.constant 0 : index
    %53 = vector.load %arg7[%c0_36, %c0_37, %c0_38] : memref<3x4x1xf32, #tpu.memory_space<vmem>>, vector<1x4x1xf32>
    %54 = vector.shape_cast %53 : vector<1x4x1xf32> to vector<4x1xf32>
    %55 = vector.broadcast %54 : vector<4x1xf32> to vector<4x148xf32>
    %56 = arith.addf %52, %55 : vector<4x148xf32>
    %c0_39 = arith.constant 0 : index
    %c0_40 = arith.constant 0 : index
    %c0_41 = arith.constant 0 : index
    %c0_42 = arith.constant 0 : index
    %57 = vector.load %arg6[%c0_39, %c0_40, %c0_41, %c0_42] : memref<3x3x4x4xf32, #tpu.memory_space<vmem>>, vector<1x1x4x4xf32>
    %58 = vector.shape_cast %57 : vector<1x1x4x4xf32> to vector<4x4xf32>
    %59 = vector.extract_strided_slice %51 {offsets = [0, 0], sizes = [4, 148], strides = [1, 1]} : vector<4x150xf32> to vector<4x148xf32>
    %cst_43 = arith.constant dense<0.000000e+00> : vector<4x148xf32>
    %60 = tpu.matmul %58, %59, %cst_43 {dimension_numbers = #tpu.dot_dimension_numbers<[1], [0], [0], [1], [0, 0, 1, 1], [], []>} : vector<4x4xf32>, vector<4x148xf32>, vector<4x148xf32> -> vector<4x148xf32>
    %61 = arith.addf %56, %60 : vector<4x148xf32>
    %c0_44 = arith.constant 0 : index
    %c1_45 = arith.constant 1 : index
    %c0_46 = arith.constant 0 : index
    %c0_47 = arith.constant 0 : index
    %62 = vector.load %arg6[%c0_44, %c1_45, %c0_46, %c0_47] : memref<3x3x4x4xf32, #tpu.memory_space<vmem>>, vector<1x1x4x4xf32>
    %63 = vector.shape_cast %62 : vector<1x1x4x4xf32> to vector<4x4xf32>
    %64 = vector.extract_strided_slice %51 {offsets = [0, 1], sizes = [4, 148], strides = [1, 1]} : vector<4x150xf32> to vector<4x148xf32>
    %cst_48 = arith.constant dense<0.000000e+00> : vector<4x148xf32>
    %65 = tpu.matmul %63, %64, %cst_48 {dimension_numbers = #tpu.dot_dimension_numbers<[1], [0], [0], [1], [0, 0, 1, 1], [], []>} : vector<4x4xf32>, vector<4x148xf32>, vector<4x148xf32> -> vector<4x148xf32>
    %66 = arith.addf %61, %65 : vector<4x148xf32>
    %c0_49 = arith.constant 0 : index
    %c2_50 = arith.constant 2 : index
    %c0_51 = arith.constant 0 : index
    %c0_52 = arith.constant 0 : index
    %67 = vector.load %arg6[%c0_49, %c2_50, %c0_51, %c0_52] : memref<3x3x4x4xf32, #tpu.memory_space<vmem>>, vector<1x1x4x4xf32>
    %68 = vector.shape_cast %67 : vector<1x1x4x4xf32> to vector<4x4xf32>
    %69 = vector.extract_strided_slice %51 {offsets = [0, 2], sizes = [4, 148], strides = [1, 1]} : vector<4x150xf32> to vector<4x148xf32>
    %cst_53 = arith.constant dense<0.000000e+00> : vector<4x148xf32>
    %70 = tpu.matmul %68, %69, %cst_53 {dimension_numbers = #tpu.dot_dimension_numbers<[1], [0], [0], [1], [0, 0, 1, 1], [], []>} : vector<4x4xf32>, vector<4x148xf32>, vector<4x148xf32> -> vector<4x148xf32>
    %71 = arith.addf %66, %70 : vector<4x148xf32>
    %c128_i32_54 = arith.constant 128 : i32
    %72 = arith.muli %arg1, %c128_i32_54 : i32
    %c10_i32 = arith.constant 10 : i32
    %73 = arith.subi %72, %c10_i32 : i32
    %74 = tpu.iota {dimensions = array<i32: 1>} : vector<1x148xi32>
    %75 = vector.broadcast %73 : i32 to vector<1x148xi32>
    %76 = arith.addi %75, %74 : vector<1x148xi32>
    %c0_i32_55 = arith.constant 0 : i32
    %77 = vector.broadcast %c0_i32_55 : i32 to vector<1x148xi32>
    %78 = arith.cmpi sge, %76, %77 : vector<1x148xi32>
    %c256_i32_56 = arith.constant 256 : i32
    %79 = vector.broadcast %c256_i32_56 : i32 to vector<1x148xi32>
    %80 = arith.cmpi slt, %76, %79 : vector<1x148xi32>
    %81 = arith.andi %78, %80 : vector<1x148xi1>
    %cst_57 = arith.constant 0.000000e+00 : f32
    %82 = vector.shape_cast %81 : vector<1x148xi1> to vector<1x148xi1>
    %83 = vector.broadcast %82 : vector<1x148xi1> to vector<4x148xi1>
    %84 = vector.broadcast %cst_57 : f32 to vector<4x148xf32>
    %85 = arith.select %83, %71, %84 : vector<4x148xi1>, vector<4x148xf32>
    %cst_58 = arith.constant 0.000000e+00 : f32
    %86 = vector.broadcast %cst_58 : f32 to vector<4x148xf32>
    %87 = arith.cmpf oge, %85, %86 : vector<4x148xf32>
    %cst_59 = arith.constant 1.000000e-01 : f32
    %88 = vector.broadcast %cst_59 : f32 to vector<4x148xf32>
    %89 = arith.mulf %88, %85 : vector<4x148xf32>
    %90 = arith.select %87, %85, %89 : vector<4x148xi1>, vector<4x148xf32>
    %c1_60 = arith.constant 1 : index
    %c0_61 = arith.constant 0 : index
    %c0_62 = arith.constant 0 : index
    %c0_63 = arith.constant 0 : index
    %91 = vector.load %arg4[%c1_60, %c0_61, %c0_62, %c0_63] : memref<3x3x4x4xf32, #tpu.memory_space<vmem>>, vector<1x1x4x4xf32>
    %92 = vector.shape_cast %91 : vector<1x1x4x4xf32> to vector<4x4xf32>
    %93 = vector.extract_strided_slice %90 {offsets = [0, 0], sizes = [4, 142], strides = [1, 1]} : vector<4x148xf32> to vector<4x142xf32>
    %cst_64 = arith.constant dense<0.000000e+00> : vector<4x142xf32>
    %94 = tpu.matmul %92, %93, %cst_64 {dimension_numbers = #tpu.dot_dimension_numbers<[1], [0], [0], [1], [0, 0, 1, 1], [], []>} : vector<4x4xf32>, vector<4x142xf32>, vector<4x142xf32> -> vector<4x142xf32>
    %c1_65 = arith.constant 1 : index
    %c1_66 = arith.constant 1 : index
    %c0_67 = arith.constant 0 : index
    %c0_68 = arith.constant 0 : index
    %95 = vector.load %arg4[%c1_65, %c1_66, %c0_67, %c0_68] : memref<3x3x4x4xf32, #tpu.memory_space<vmem>>, vector<1x1x4x4xf32>
    %96 = vector.shape_cast %95 : vector<1x1x4x4xf32> to vector<4x4xf32>
    %97 = vector.extract_strided_slice %90 {offsets = [0, 3], sizes = [4, 142], strides = [1, 1]} : vector<4x148xf32> to vector<4x142xf32>
    %cst_69 = arith.constant dense<0.000000e+00> : vector<4x142xf32>
    %98 = tpu.matmul %96, %97, %cst_69 {dimension_numbers = #tpu.dot_dimension_numbers<[1], [0], [0], [1], [0, 0, 1, 1], [], []>} : vector<4x4xf32>, vector<4x142xf32>, vector<4x142xf32> -> vector<4x142xf32>
    %99 = arith.addf %94, %98 : vector<4x142xf32>
    %c1_70 = arith.constant 1 : index
    %c2_71 = arith.constant 2 : index
    %c0_72 = arith.constant 0 : index
    %c0_73 = arith.constant 0 : index
    %100 = vector.load %arg4[%c1_70, %c2_71, %c0_72, %c0_73] : memref<3x3x4x4xf32, #tpu.memory_space<vmem>>, vector<1x1x4x4xf32>
    %101 = vector.shape_cast %100 : vector<1x1x4x4xf32> to vector<4x4xf32>
    %102 = vector.extract_strided_slice %90 {offsets = [0, 6], sizes = [4, 142], strides = [1, 1]} : vector<4x148xf32> to vector<4x142xf32>
    %cst_74 = arith.constant dense<0.000000e+00> : vector<4x142xf32>
    %103 = tpu.matmul %101, %102, %cst_74 {dimension_numbers = #tpu.dot_dimension_numbers<[1], [0], [0], [1], [0, 0, 1, 1], [], []>} : vector<4x4xf32>, vector<4x142xf32>, vector<4x142xf32> -> vector<4x142xf32>
    %104 = arith.addf %99, %103 : vector<4x142xf32>
    %c1_75 = arith.constant 1 : index
    %c0_76 = arith.constant 0 : index
    %c0_77 = arith.constant 0 : index
    %105 = vector.load %arg5[%c1_75, %c0_76, %c0_77] : memref<3x4x1xf32, #tpu.memory_space<vmem>>, vector<1x4x1xf32>
    %106 = vector.shape_cast %105 : vector<1x4x1xf32> to vector<4x1xf32>
    %107 = vector.broadcast %106 : vector<4x1xf32> to vector<4x142xf32>
    %108 = arith.addf %104, %107 : vector<4x142xf32>
    %c128_i32_78 = arith.constant 128 : i32
    %109 = arith.muli %arg1, %c128_i32_78 : i32
    %c7_i32 = arith.constant 7 : i32
    %110 = arith.subi %109, %c7_i32 : i32
    %111 = tpu.iota {dimensions = array<i32: 1>} : vector<1x142xi32>
    %112 = vector.broadcast %110 : i32 to vector<1x142xi32>
    %113 = arith.addi %112, %111 : vector<1x142xi32>
    %c0_i32_79 = arith.constant 0 : i32
    %114 = vector.broadcast %c0_i32_79 : i32 to vector<1x142xi32>
    %115 = arith.cmpi sge, %113, %114 : vector<1x142xi32>
    %c256_i32_80 = arith.constant 256 : i32
    %116 = vector.broadcast %c256_i32_80 : i32 to vector<1x142xi32>
    %117 = arith.cmpi slt, %113, %116 : vector<1x142xi32>
    %118 = arith.andi %115, %117 : vector<1x142xi1>
    %cst_81 = arith.constant 0.000000e+00 : f32
    %119 = vector.shape_cast %118 : vector<1x142xi1> to vector<1x142xi1>
    %120 = vector.broadcast %119 : vector<1x142xi1> to vector<4x142xi1>
    %121 = vector.broadcast %cst_81 : f32 to vector<4x142xf32>
    %122 = arith.select %120, %108, %121 : vector<4x142xi1>, vector<4x142xf32>
    %cst_82 = arith.constant 0.000000e+00 : f32
    %123 = vector.broadcast %cst_82 : f32 to vector<4x142xf32>
    %124 = arith.cmpf oge, %122, %123 : vector<4x142xf32>
    %cst_83 = arith.constant 1.000000e-01 : f32
    %125 = vector.broadcast %cst_83 : f32 to vector<4x142xf32>
    %126 = arith.mulf %125, %122 : vector<4x142xf32>
    %127 = arith.select %124, %122, %126 : vector<4x142xi1>, vector<4x142xf32>
    %128 = vector.extract_strided_slice %85 {offsets = [0, 4], sizes = [4, 140], strides = [1, 1]} : vector<4x148xf32> to vector<4x140xf32>
    %c1_84 = arith.constant 1 : index
    %c0_85 = arith.constant 0 : index
    %c0_86 = arith.constant 0 : index
    %129 = vector.load %arg7[%c1_84, %c0_85, %c0_86] : memref<3x4x1xf32, #tpu.memory_space<vmem>>, vector<1x4x1xf32>
    %130 = vector.shape_cast %129 : vector<1x4x1xf32> to vector<4x1xf32>
    %131 = vector.broadcast %130 : vector<4x1xf32> to vector<4x140xf32>
    %132 = arith.addf %128, %131 : vector<4x140xf32>
    %c1_87 = arith.constant 1 : index
    %c0_88 = arith.constant 0 : index
    %c0_89 = arith.constant 0 : index
    %c0_90 = arith.constant 0 : index
    %133 = vector.load %arg6[%c1_87, %c0_88, %c0_89, %c0_90] : memref<3x3x4x4xf32, #tpu.memory_space<vmem>>, vector<1x1x4x4xf32>
    %134 = vector.shape_cast %133 : vector<1x1x4x4xf32> to vector<4x4xf32>
    %135 = vector.extract_strided_slice %127 {offsets = [0, 0], sizes = [4, 140], strides = [1, 1]} : vector<4x142xf32> to vector<4x140xf32>
    %cst_91 = arith.constant dense<0.000000e+00> : vector<4x140xf32>
    %136 = tpu.matmul %134, %135, %cst_91 {dimension_numbers = #tpu.dot_dimension_numbers<[1], [0], [0], [1], [0, 0, 1, 1], [], []>} : vector<4x4xf32>, vector<4x140xf32>, vector<4x140xf32> -> vector<4x140xf32>
    %137 = arith.addf %132, %136 : vector<4x140xf32>
    %c1_92 = arith.constant 1 : index
    %c1_93 = arith.constant 1 : index
    %c0_94 = arith.constant 0 : index
    %c0_95 = arith.constant 0 : index
    %138 = vector.load %arg6[%c1_92, %c1_93, %c0_94, %c0_95] : memref<3x3x4x4xf32, #tpu.memory_space<vmem>>, vector<1x1x4x4xf32>
    %139 = vector.shape_cast %138 : vector<1x1x4x4xf32> to vector<4x4xf32>
    %140 = vector.extract_strided_slice %127 {offsets = [0, 1], sizes = [4, 140], strides = [1, 1]} : vector<4x142xf32> to vector<4x140xf32>
    %cst_96 = arith.constant dense<0.000000e+00> : vector<4x140xf32>
    %141 = tpu.matmul %139, %140, %cst_96 {dimension_numbers = #tpu.dot_dimension_numbers<[1], [0], [0], [1], [0, 0, 1, 1], [], []>} : vector<4x4xf32>, vector<4x140xf32>, vector<4x140xf32> -> vector<4x140xf32>
    %142 = arith.addf %137, %141 : vector<4x140xf32>
    %c1_97 = arith.constant 1 : index
    %c2_98 = arith.constant 2 : index
    %c0_99 = arith.constant 0 : index
    %c0_100 = arith.constant 0 : index
    %143 = vector.load %arg6[%c1_97, %c2_98, %c0_99, %c0_100] : memref<3x3x4x4xf32, #tpu.memory_space<vmem>>, vector<1x1x4x4xf32>
    %144 = vector.shape_cast %143 : vector<1x1x4x4xf32> to vector<4x4xf32>
    %145 = vector.extract_strided_slice %127 {offsets = [0, 2], sizes = [4, 140], strides = [1, 1]} : vector<4x142xf32> to vector<4x140xf32>
    %cst_101 = arith.constant dense<0.000000e+00> : vector<4x140xf32>
    %146 = tpu.matmul %144, %145, %cst_101 {dimension_numbers = #tpu.dot_dimension_numbers<[1], [0], [0], [1], [0, 0, 1, 1], [], []>} : vector<4x4xf32>, vector<4x140xf32>, vector<4x140xf32> -> vector<4x140xf32>
    %147 = arith.addf %142, %146 : vector<4x140xf32>
    %c128_i32_102 = arith.constant 128 : i32
    %148 = arith.muli %arg1, %c128_i32_102 : i32
    %c6_i32 = arith.constant 6 : i32
    %149 = arith.subi %148, %c6_i32 : i32
    %150 = tpu.iota {dimensions = array<i32: 1>} : vector<1x140xi32>
    %151 = vector.broadcast %149 : i32 to vector<1x140xi32>
    %152 = arith.addi %151, %150 : vector<1x140xi32>
    %c0_i32_103 = arith.constant 0 : i32
    %153 = vector.broadcast %c0_i32_103 : i32 to vector<1x140xi32>
    %154 = arith.cmpi sge, %152, %153 : vector<1x140xi32>
    %c256_i32_104 = arith.constant 256 : i32
    %155 = vector.broadcast %c256_i32_104 : i32 to vector<1x140xi32>
    %156 = arith.cmpi slt, %152, %155 : vector<1x140xi32>
    %157 = arith.andi %154, %156 : vector<1x140xi1>
    %cst_105 = arith.constant 0.000000e+00 : f32
    %158 = vector.shape_cast %157 : vector<1x140xi1> to vector<1x140xi1>
    %159 = vector.broadcast %158 : vector<1x140xi1> to vector<4x140xi1>
    %160 = vector.broadcast %cst_105 : f32 to vector<4x140xf32>
    %161 = arith.select %159, %147, %160 : vector<4x140xi1>, vector<4x140xf32>
    %cst_106 = arith.constant 0.000000e+00 : f32
    %162 = vector.broadcast %cst_106 : f32 to vector<4x140xf32>
    %163 = arith.cmpf oge, %161, %162 : vector<4x140xf32>
    %cst_107 = arith.constant 1.000000e-01 : f32
    %164 = vector.broadcast %cst_107 : f32 to vector<4x140xf32>
    %165 = arith.mulf %164, %161 : vector<4x140xf32>
    %166 = arith.select %163, %161, %165 : vector<4x140xi1>, vector<4x140xf32>
    %c2_108 = arith.constant 2 : index
    %c0_109 = arith.constant 0 : index
    %c0_110 = arith.constant 0 : index
    %c0_111 = arith.constant 0 : index
    %167 = vector.load %arg4[%c2_108, %c0_109, %c0_110, %c0_111] : memref<3x3x4x4xf32, #tpu.memory_space<vmem>>, vector<1x1x4x4xf32>
    %168 = vector.shape_cast %167 : vector<1x1x4x4xf32> to vector<4x4xf32>
    %169 = vector.extract_strided_slice %166 {offsets = [0, 0], sizes = [4, 130], strides = [1, 1]} : vector<4x140xf32> to vector<4x130xf32>
    %cst_112 = arith.constant dense<0.000000e+00> : vector<4x130xf32>
    %170 = tpu.matmul %168, %169, %cst_112 {dimension_numbers = #tpu.dot_dimension_numbers<[1], [0], [0], [1], [0, 0, 1, 1], [], []>} : vector<4x4xf32>, vector<4x130xf32>, vector<4x130xf32> -> vector<4x130xf32>
    %c2_113 = arith.constant 2 : index
    %c1_114 = arith.constant 1 : index
    %c0_115 = arith.constant 0 : index
    %c0_116 = arith.constant 0 : index
    %171 = vector.load %arg4[%c2_113, %c1_114, %c0_115, %c0_116] : memref<3x3x4x4xf32, #tpu.memory_space<vmem>>, vector<1x1x4x4xf32>
    %172 = vector.shape_cast %171 : vector<1x1x4x4xf32> to vector<4x4xf32>
    %173 = vector.extract_strided_slice %166 {offsets = [0, 5], sizes = [4, 130], strides = [1, 1]} : vector<4x140xf32> to vector<4x130xf32>
    %cst_117 = arith.constant dense<0.000000e+00> : vector<4x130xf32>
    %174 = tpu.matmul %172, %173, %cst_117 {dimension_numbers = #tpu.dot_dimension_numbers<[1], [0], [0], [1], [0, 0, 1, 1], [], []>} : vector<4x4xf32>, vector<4x130xf32>, vector<4x130xf32> -> vector<4x130xf32>
    %175 = arith.addf %170, %174 : vector<4x130xf32>
    %c2_118 = arith.constant 2 : index
    %c2_119 = arith.constant 2 : index
    %c0_120 = arith.constant 0 : index
    %c0_121 = arith.constant 0 : index
    %176 = vector.load %arg4[%c2_118, %c2_119, %c0_120, %c0_121] : memref<3x3x4x4xf32, #tpu.memory_space<vmem>>, vector<1x1x4x4xf32>
    %177 = vector.shape_cast %176 : vector<1x1x4x4xf32> to vector<4x4xf32>
    %178 = vector.extract_strided_slice %166 {offsets = [0, 10], sizes = [4, 130], strides = [1, 1]} : vector<4x140xf32> to vector<4x130xf32>
    %cst_122 = arith.constant dense<0.000000e+00> : vector<4x130xf32>
    %179 = tpu.matmul %177, %178, %cst_122 {dimension_numbers = #tpu.dot_dimension_numbers<[1], [0], [0], [1], [0, 0, 1, 1], [], []>} : vector<4x4xf32>, vector<4x130xf32>, vector<4x130xf32> -> vector<4x130xf32>
    %180 = arith.addf %175, %179 : vector<4x130xf32>
    %c2_123 = arith.constant 2 : index
    %c0_124 = arith.constant 0 : index
    %c0_125 = arith.constant 0 : index
    %181 = vector.load %arg5[%c2_123, %c0_124, %c0_125] : memref<3x4x1xf32, #tpu.memory_space<vmem>>, vector<1x4x1xf32>
    %182 = vector.shape_cast %181 : vector<1x4x1xf32> to vector<4x1xf32>
    %183 = vector.broadcast %182 : vector<4x1xf32> to vector<4x130xf32>
    %184 = arith.addf %180, %183 : vector<4x130xf32>
    %c128_i32_126 = arith.constant 128 : i32
    %185 = arith.muli %arg1, %c128_i32_126 : i32
    %c1_i32 = arith.constant 1 : i32
    %186 = arith.subi %185, %c1_i32 : i32
    %187 = tpu.iota {dimensions = array<i32: 1>} : vector<1x130xi32>
    %188 = vector.broadcast %186 : i32 to vector<1x130xi32>
    %189 = arith.addi %188, %187 : vector<1x130xi32>
    %c0_i32_127 = arith.constant 0 : i32
    %190 = vector.broadcast %c0_i32_127 : i32 to vector<1x130xi32>
    %191 = arith.cmpi sge, %189, %190 : vector<1x130xi32>
    %c256_i32_128 = arith.constant 256 : i32
    %192 = vector.broadcast %c256_i32_128 : i32 to vector<1x130xi32>
    %193 = arith.cmpi slt, %189, %192 : vector<1x130xi32>
    %194 = arith.andi %191, %193 : vector<1x130xi1>
    %cst_129 = arith.constant 0.000000e+00 : f32
    %195 = vector.shape_cast %194 : vector<1x130xi1> to vector<1x130xi1>
    %196 = vector.broadcast %195 : vector<1x130xi1> to vector<4x130xi1>
    %197 = vector.broadcast %cst_129 : f32 to vector<4x130xf32>
    %198 = arith.select %196, %184, %197 : vector<4x130xi1>, vector<4x130xf32>
    %cst_130 = arith.constant 0.000000e+00 : f32
    %199 = vector.broadcast %cst_130 : f32 to vector<4x130xf32>
    %200 = arith.cmpf oge, %198, %199 : vector<4x130xf32>
    %cst_131 = arith.constant 1.000000e-01 : f32
    %201 = vector.broadcast %cst_131 : f32 to vector<4x130xf32>
    %202 = arith.mulf %201, %198 : vector<4x130xf32>
    %203 = arith.select %200, %198, %202 : vector<4x130xi1>, vector<4x130xf32>
    %204 = vector.extract_strided_slice %161 {offsets = [0, 6], sizes = [4, 128], strides = [1, 1]} : vector<4x140xf32> to vector<4x128xf32>
    %c2_132 = arith.constant 2 : index
    %c0_133 = arith.constant 0 : index
    %c0_134 = arith.constant 0 : index
    %205 = vector.load %arg7[%c2_132, %c0_133, %c0_134] : memref<3x4x1xf32, #tpu.memory_space<vmem>>, vector<1x4x1xf32>
    %206 = vector.shape_cast %205 : vector<1x4x1xf32> to vector<4x1xf32>
    %207 = vector.broadcast %206 : vector<4x1xf32> to vector<4x128xf32>
    %208 = arith.addf %204, %207 : vector<4x128xf32>
    %c2_135 = arith.constant 2 : index
    %c0_136 = arith.constant 0 : index
    %c0_137 = arith.constant 0 : index
    %c0_138 = arith.constant 0 : index
    %209 = vector.load %arg6[%c2_135, %c0_136, %c0_137, %c0_138] : memref<3x3x4x4xf32, #tpu.memory_space<vmem>>, vector<1x1x4x4xf32>
    %210 = vector.shape_cast %209 : vector<1x1x4x4xf32> to vector<4x4xf32>
    %211 = vector.extract_strided_slice %203 {offsets = [0, 0], sizes = [4, 128], strides = [1, 1]} : vector<4x130xf32> to vector<4x128xf32>
    %cst_139 = arith.constant dense<0.000000e+00> : vector<4x128xf32>
    %212 = tpu.matmul %210, %211, %cst_139 {dimension_numbers = #tpu.dot_dimension_numbers<[1], [0], [0], [1], [0, 0, 1, 1], [], []>} : vector<4x4xf32>, vector<4x128xf32>, vector<4x128xf32> -> vector<4x128xf32>
    %213 = arith.addf %208, %212 : vector<4x128xf32>
    %c2_140 = arith.constant 2 : index
    %c1_141 = arith.constant 1 : index
    %c0_142 = arith.constant 0 : index
    %c0_143 = arith.constant 0 : index
    %214 = vector.load %arg6[%c2_140, %c1_141, %c0_142, %c0_143] : memref<3x3x4x4xf32, #tpu.memory_space<vmem>>, vector<1x1x4x4xf32>
    %215 = vector.shape_cast %214 : vector<1x1x4x4xf32> to vector<4x4xf32>
    %216 = vector.extract_strided_slice %203 {offsets = [0, 1], sizes = [4, 128], strides = [1, 1]} : vector<4x130xf32> to vector<4x128xf32>
    %cst_144 = arith.constant dense<0.000000e+00> : vector<4x128xf32>
    %217 = tpu.matmul %215, %216, %cst_144 {dimension_numbers = #tpu.dot_dimension_numbers<[1], [0], [0], [1], [0, 0, 1, 1], [], []>} : vector<4x4xf32>, vector<4x128xf32>, vector<4x128xf32> -> vector<4x128xf32>
    %218 = arith.addf %213, %217 : vector<4x128xf32>
    %c2_145 = arith.constant 2 : index
    %c2_146 = arith.constant 2 : index
    %c0_147 = arith.constant 0 : index
    %c0_148 = arith.constant 0 : index
    %219 = vector.load %arg6[%c2_145, %c2_146, %c0_147, %c0_148] : memref<3x3x4x4xf32, #tpu.memory_space<vmem>>, vector<1x1x4x4xf32>
    %220 = vector.shape_cast %219 : vector<1x1x4x4xf32> to vector<4x4xf32>
    %221 = vector.extract_strided_slice %203 {offsets = [0, 2], sizes = [4, 128], strides = [1, 1]} : vector<4x130xf32> to vector<4x128xf32>
    %cst_149 = arith.constant dense<0.000000e+00> : vector<4x128xf32>
    %222 = tpu.matmul %220, %221, %cst_149 {dimension_numbers = #tpu.dot_dimension_numbers<[1], [0], [0], [1], [0, 0, 1, 1], [], []>} : vector<4x4xf32>, vector<4x128xf32>, vector<4x128xf32> -> vector<4x128xf32>
    %223 = arith.addf %218, %222 : vector<4x128xf32>
    %c128_i32_150 = arith.constant 128 : i32
    %224 = arith.muli %arg1, %c128_i32_150 : i32
    %c0_i32_151 = arith.constant 0 : i32
    %225 = arith.subi %224, %c0_i32_151 : i32
    %226 = tpu.iota {dimensions = array<i32: 1>} : vector<1x128xi32>
    %227 = vector.broadcast %225 : i32 to vector<1x128xi32>
    %228 = arith.addi %227, %226 : vector<1x128xi32>
    %c0_i32_152 = arith.constant 0 : i32
    %229 = vector.broadcast %c0_i32_152 : i32 to vector<1x128xi32>
    %230 = arith.cmpi sge, %228, %229 : vector<1x128xi32>
    %c256_i32_153 = arith.constant 256 : i32
    %231 = vector.broadcast %c256_i32_153 : i32 to vector<1x128xi32>
    %232 = arith.cmpi slt, %228, %231 : vector<1x128xi32>
    %233 = arith.andi %230, %232 : vector<1x128xi1>
    %cst_154 = arith.constant 0.000000e+00 : f32
    %234 = vector.shape_cast %233 : vector<1x128xi1> to vector<1x128xi1>
    %235 = vector.broadcast %234 : vector<1x128xi1> to vector<4x128xi1>
    %236 = vector.broadcast %cst_154 : f32 to vector<4x128xf32>
    %237 = arith.select %235, %223, %236 : vector<4x128xi1>, vector<4x128xf32>
    %c0_155 = arith.constant 0 : index
    %c0_156 = arith.constant 0 : index
    %c0_157 = arith.constant 0 : index
    %238 = vector.load %arg8[%c0_155, %c0_156, %c0_157] : memref<1x4x128xf32, #tpu.memory_space<vmem>>, vector<1x4x128xf32>
    %239 = vector.shape_cast %238 : vector<1x4x128xf32> to vector<4x128xf32>
    %240 = vector.shape_cast %237 : vector<4x128xf32> to vector<1x4x128xf32>
    tpu.vector_store %arg8[%c0_155, %c0_156, %c0_157], %240 {strides = array<i32>} : memref<1x4x128xf32, #tpu.memory_space<vmem>>, vector<1x4x128xf32>,
    return
  }
  func.func @transform_0(%arg0: i32, %arg1: i32) -> (i32, i32, i32) {
    %c0_i32 = arith.constant 0 : i32
    %c0_i32_0 = arith.constant 0 : i32
    return %arg0, %c0_i32, %arg1 : i32, i32, i32
  }
  func.func @transform_1(%arg0: i32, %arg1: i32) -> (i32, i32, i32, i32) {
    %c0_i32 = arith.constant 0 : i32
    %c0_i32_0 = arith.constant 0 : i32
    %c0_i32_1 = arith.constant 0 : i32
    return %arg0, %arg1, %c0_i32, %c0_i32_0 : i32, i32, i32, i32
  }
  func.func @transform_2(%arg0: i32, %arg1: i32) -> (i32, i32, i32, i32) {
    %c0_i32 = arith.constant 0 : i32
    %c0_i32_0 = arith.constant 0 : i32
    %c0_i32_1 = arith.constant 0 : i32
    %c0_i32_2 = arith.constant 0 : i32
    %c0_i32_3 = arith.constant 0 : i32
    return %c0_i32, %c0_i32_0, %c0_i32_1, %c0_i32_2 : i32, i32, i32, i32
  }
  func.func @transform_3(%arg0: i32, %arg1: i32) -> (i32, i32, i32) {
    %c0_i32 = arith.constant 0 : i32
    %c0_i32_0 = arith.constant 0 : i32
    %c0_i32_1 = arith.constant 0 : i32
    %c0_i32_2 = arith.constant 0 : i32
    return %c0_i32, %c0_i32_0, %c0_i32_1 : i32, i32, i32
  }
  func.func @transform_4(%arg0: i32, %arg1: i32) -> (i32, i32, i32, i32) {
    %c0_i32 = arith.constant 0 : i32
    %c0_i32_0 = arith.constant 0 : i32
    %c0_i32_1 = arith.constant 0 : i32
    %c0_i32_2 = arith.constant 0 : i32
    %c0_i32_3 = arith.constant 0 : i32
    return %c0_i32, %c0_i32_0, %c0_i32_1, %c0_i32_2 : i32, i32, i32, i32
  }
  func.func @transform_5(%arg0: i32, %arg1: i32) -> (i32, i32, i32) {
    %c0_i32 = arith.constant 0 : i32
    %c0_i32_0 = arith.constant 0 : i32
    %c0_i32_1 = arith.constant 0 : i32
    %c0_i32_2 = arith.constant 0 : i32
    return %c0_i32, %c0_i32_0, %c0_i32_1 : i32, i32, i32
  }
  func.func @transform_6(%arg0: i32, %arg1: i32) -> (i32, i32, i32) {
    %c0_i32 = arith.constant 0 : i32
    %c0_i32_0 = arith.constant 0 : i32
    return %arg0, %c0_i32, %arg1 : i32, i32, i32
  }
}

</mosaic_0001>

<llo_original>
// kernel: resblock_forward.1
$region0: #{resblock_forward.1}
  #allocation0 [shape = 'u32[]', space=smem, size = 0x4, offset = 0x4, fixed_abs, tag = 'smem constant byte address 0x4 - core index']
  #allocation1 [shape = 'u32[72,128]{1,0:T(1,128)}', space=vmem, size = 0x9000, scoped, tag = 'internal scratch']
  #allocation2 [shape = 'f32[4,152]{1,0:T(4,128)}', space=vmem, size = 0x1000, scoped, tag = 'scratch operand']
  %s0 = inlined_call_operand.vmem [shape: f32[2,4,256], index: 0, kind: input, shape index: {}]
  %s1 = inlined_call_operand.vmem [shape: f32[2,2,4,24], index: 1, kind: input, shape index: {}]
  %s2 = inlined_call_operand.vmem [shape: f32[3,3,4,4], index: 2, kind: input, shape index: {}]
  %s3 = inlined_call_operand.vmem [shape: f32[3,4,1], index: 3, kind: input, shape index: {}]
  %s4 = inlined_call_operand.vmem [shape: f32[3,3,4,4], index: 4, kind: input, shape index: {}]
  %s5 = inlined_call_operand.vmem [shape: f32[3,4,1], index: 5, kind: input, shape index: {}]
  %s6 = inlined_call_operand.hbm [shape: f32[2,4,256], index: 6, kind: output, shape index: {}]
  %s7 = sld [smem:[#allocation0]]
  $region57: #{resblock_forward.1} parent=0
    _
  %s9 = ssub.s32 1, %s7
  %s10 = scalar_select 0, %s9, %s7
  $region1: #{resblock_forward.1} parent=0
    #allocation3 [shape = 'u8[4096]{0}', space=vmem, size = 0x1000, scoped, tag = 'output window, operand 0']
    #allocation4 [shape = 's32[2]{0}', space=sflag, size = 0x8, scoped, tag = 'scoped memory for resblock_forward.1']
    %11 = vsyncpa [#allocation4], 0
    %s12 = scalar_lea.sflag [#allocation4], 1
    %13 = vsyncpa %s12, 0
    loop: start=0, step=1, limit=6
    $region2: #{resblock_forward.1} parent=1 // loop_pre_header
      _
    $region3: #{resblock_forward.1} parent=1 // loop_header
      %s15 = sphi 0, %s19
      %p16 = scmp.ge.s32.totalorder %s15, 6
      %s22 = sphi 0, %s34
      %s23 = sphi 0, %s30
      %s24 = sphi 0, %s22
      %s25 = sphi 0, %s23
      %s26 = sphi 0, %s24
      %s27 = sphi 0, %s25
      %s39 = sphi 0, %s41
      %s42 = sphi 0, %s39
      %s43 = sphi 0, %s42
      %s59 = sphi 0, %s43
      %s67 = sphi 0, %s69
      %s70 = sphi 0, %s67
      %s71 = sphi 0, %s70
      %s87 = sphi 0, %s71
      %s91 = sphi 0, %s91
      %s93 = sphi 0, %s91
      %s94 = sphi 0, %s93
      %s108 = sphi 0, %s94
      %s112 = sphi 0, %s112
      %s114 = sphi 0, %s112
      %s115 = sphi 0, %s114
      %s129 = sphi 0, %s115
      %s133 = sphi 0, %s133
      %s135 = sphi 0, %s133
      %s136 = sphi 0, %s135
      %s150 = sphi 0, %s136
      %s154 = sphi 0, %s154
      %s156 = sphi 0, %s154
      %s157 = sphi 0, %s156
      %s171 = sphi 0, %s157
      %s179 = sphi 0, %s181
      %s182 = sphi 0, %s179
      %s183 = sphi 0, %s182
      %s199 = sphi 0, %s183
    $region4: #{resblock_forward.1} parent=1 // loop_header_branch
      %18 = sbr.rel (%p16) target = $region8
    $region5: #{resblock_forward.1} parent=1 // loop_body
      %s20 = ssub.s32 %s15, 1
      %s21 = ssub.s32 %s15, 2
      %s28 = sadd.s32 1, %s23
      %p29 = scmp.ge.s32.totalorder %s28, 2
      %s30 = scalar_select %p29, 0, %s28
      %s31 = sadd.s32 1, %s22
      %s32 = scalar_select %p29, %s31, %s22
      %p33 = scmp.ge.s32.totalorder %s32, 2
      %s34 = scalar_select %p33, 0, %s32
      %s35 = ssub.s32 %s22, %s34
      %s36 = ssub.s32 %s23, %s30
      %s37 = sor.u32 %s35, %s36
      %p38 = scmp.eq.s32.totalorder %s37, 0
      %s40 = sadd.s32 %s39, 1
      %s41 = scalar_select %p38, %s39, %s40
      %p44 = pneg %p38
      %p45 = scmp.eq.s32.totalorder %s15, 3
      %p46 = por %p44, %p45
      %p47 = scmp.ne.s32.totalorder %s39, %s42
      %p48 = scmp.eq.s32.totalorder %s15, 0
      %p49 = por %p47, %p48
      %p50 = scmp.ne.s32.totalorder %s39, %s42
      %p51 = scmp.eq.s32.totalorder %s20, 3
      %p52 = por %p50, %p51
      %p53 = scmp.ne.s32.totalorder %s42, %s43
      %p54 = scmp.eq.s32.totalorder %s20, 0
      %p55 = por %p53, %p54
      %p56 = scmp.ne.s32.totalorder %s42, %s43
      %p57 = scmp.eq.s32.totalorder %s21, 3
      %p58 = por %p56, %p57
      %p60 = scmp.ne.s32.totalorder %s43, %s59
      %p61 = scmp.eq.s32.totalorder %s21, 0
      %p62 = por %p60, %p61
      %s63 = ssub.s32 %s22, %s34
      %s64 = ssub.s32 %s23, %s30
      %s65 = sor.u32 %s63, %s64
      %p66 = scmp.eq.s32.totalorder %s65, 0
      %s68 = sadd.s32 %s67, 1
      %s69 = scalar_select %p66, %s67, %s68
      %p72 = pneg %p66
      %p73 = scmp.eq.s32.totalorder %s15, 3
      %p74 = por %p72, %p73
      %p75 = scmp.ne.s32.totalorder %s67, %s70
      %p76 = scmp.eq.s32.totalorder %s15, 0
      %p77 = por %p75, %p76
      %p78 = scmp.ne.s32.totalorder %s67, %s70
      %p79 = scmp.eq.s32.totalorder %s20, 3
      %p80 = por %p78, %p79
      %p81 = scmp.ne.s32.totalorder %s70, %s71
      %p82 = scmp.eq.s32.totalorder %s20, 0
      %p83 = por %p81, %p82
      %p84 = scmp.ne.s32.totalorder %s70, %s71
      %p85 = scmp.eq.s32.totalorder %s21, 3
      %p86 = por %p84, %p85
      %p88 = scmp.ne.s32.totalorder %s71, %s87
      %p89 = scmp.eq.s32.totalorder %s21, 0
      %p90 = por %p88, %p89
      %s92 = sadd.s32 %s91, 1
      %p95 = scmp.eq.s32.totalorder %s15, 3
      %p96 = scmp.ne.s32.totalorder %s91, %s93
      %p97 = scmp.eq.s32.totalorder %s15, 0
      %p98 = por %p96, %p97
      %p99 = scmp.ne.s32.totalorder %s91, %s93
      %p100 = scmp.eq.s32.totalorder %s20, 3
      %p101 = por %p99, %p100
      %p102 = scmp.ne.s32.totalorder %s93, %s94
      %p103 = scmp.eq.s32.totalorder %s20, 0
      %p104 = por %p102, %p103
      %p105 = scmp.ne.s32.totalorder %s93, %s94
      %p106 = scmp.eq.s32.totalorder %s21, 3
      %p107 = por %p105, %p106
      %p109 = scmp.ne.s32.totalorder %s94, %s108
      %p110 = scmp.eq.s32.totalorder %s21, 0
      %p111 = por %p109, %p110
      %s113 = sadd.s32 %s112, 1
      %p116 = scmp.eq.s32.totalorder %s15, 3
      %p117 = scmp.ne.s32.totalorder %s112, %s114
      %p118 = scmp.eq.s32.totalorder %s15, 0
      %p119 = por %p117, %p118
      %p120 = scmp.ne.s32.totalorder %s112, %s114
      %p121 = scmp.eq.s32.totalorder %s20, 3
      %p122 = por %p120, %p121
      %p123 = scmp.ne.s32.totalorder %s114, %s115
      %p124 = scmp.eq.s32.totalorder %s20, 0
      %p125 = por %p123, %p124
      %p126 = scmp.ne.s32.totalorder %s114, %s115
      %p127 = scmp.eq.s32.totalorder %s21, 3
      %p128 = por %p126, %p127
      %p130 = scmp.ne.s32.totalorder %s115, %s129
      %p131 = scmp.eq.s32.totalorder %s21, 0
      %p132 = por %p130, %p131
      %s134 = sadd.s32 %s133, 1
      %p137 = scmp.eq.s32.totalorder %s15, 3
      %p138 = scmp.ne.s32.totalorder %s133, %s135
      %p139 = scmp.eq.s32.totalorder %s15, 0
      %p140 = por %p138, %p139
      %p141 = scmp.ne.s32.totalorder %s133, %s135
      %p142 = scmp.eq.s32.totalorder %s20, 3
      %p143 = por %p141, %p142
      %p144 = scmp.ne.s32.totalorder %s135, %s136
      %p145 = scmp.eq.s32.totalorder %s20, 0
      %p146 = por %p144, %p145
      %p147 = scmp.ne.s32.totalorder %s135, %s136
      %p148 = scmp.eq.s32.totalorder %s21, 3
      %p149 = por %p147, %p148
      %p151 = scmp.ne.s32.totalorder %s136, %s150
      %p152 = scmp.eq.s32.totalorder %s21, 0
      %p153 = por %p151, %p152
      %s155 = sadd.s32 %s154, 1
      %p158 = scmp.eq.s32.totalorder %s15, 3
      %p159 = scmp.ne.s32.totalorder %s154, %s156
      %p160 = scmp.eq.s32.totalorder %s15, 0
      %p161 = por %p159, %p160
      %p162 = scmp.ne.s32.totalorder %s154, %s156
      %p163 = scmp.eq.s32.totalorder %s20, 3
      %p164 = por %p162, %p163
      %p165 = scmp.ne.s32.totalorder %s156, %s157
      %p166 = scmp.eq.s32.totalorder %s20, 0
      %p167 = por %p165, %p166
      %p168 = scmp.ne.s32.totalorder %s156, %s157
      %p169 = scmp.eq.s32.totalorder %s21, 3
      %p170 = por %p168, %p169
      %p172 = scmp.ne.s32.totalorder %s157, %s171
      %p173 = scmp.eq.s32.totalorder %s21, 0
      %p174 = por %p172, %p173
      %s175 = ssub.s32 %s22, %s34
      %s176 = ssub.s32 %s23, %s30
      %s177 = sor.u32 %s175, %s176
      %p178 = scmp.eq.s32.totalorder %s177, 0
      %s180 = sadd.s32 %s179, 1
      %s181 = scalar_select %p178, %s179, %s180
      %p184 = pneg %p178
      %p185 = scmp.eq.s32.totalorder %s15, 3
      %p186 = por %p184, %p185
      %p187 = scmp.ne.s32.totalorder %s179, %s182
      %p188 = scmp.eq.s32.totalorder %s15, 0
      %p189 = por %p187, %p188
      %p190 = scmp.ne.s32.totalorder %s179, %s182
      %p191 = scmp.eq.s32.totalorder %s20, 3
      %p192 = por %p190, %p191
      %p193 = scmp.ne.s32.totalorder %s182, %s183
      %p194 = scmp.eq.s32.totalorder %s20, 0
      %p195 = por %p193, %p194
      %p196 = scmp.ne.s32.totalorder %s182, %s183
      %p197 = scmp.eq.s32.totalorder %s21, 3
      %p198 = por %p196, %p197
      %p200 = scmp.ne.s32.totalorder %s183, %s199
      %p201 = scmp.eq.s32.totalorder %s21, 0
      %p202 = por %p200, %p201
      %p203 = scmp.le.s32.totalorder 1, %s15
      %p204 = scmp.lt.s32.totalorder %s15, 5
      %p205 = pnand %p203, %p204
      %p206 = pneg %p205
      // Predicated region
      $region9: #{resblock_forward.1} parent=5 // pred_check
        _
      $region10: #{resblock_forward.1} parent=5 // pred_check_branch
        %208 = sbr.rel (%p205) target = $region12
      $region11: #{resblock_forward.1} parent=5 // pred_region
        %s209 = ssub.s32 %s15, 1
        // Predicated region
        $region13: #{resblock_forward.1} parent=11 // pred_check
          %p210 = pneg %p104
        $region14: #{resblock_forward.1} parent=11 // pred_check_branch
          %212 = sbr.rel (%p210) target = $region16
        $region15: #{resblock_forward.1} parent=11 // pred_region
          _
        $region16: #{resblock_forward.1} parent=11 // pred_fallthru
          _
        // Predicated region
        $region17: #{resblock_forward.1} parent=11 // pred_check
          %p213 = pneg %p125
        $region18: #{resblock_forward.1} parent=11 // pred_check_branch
          %215 = sbr.rel (%p213) target = $region20
        $region19: #{resblock_forward.1} parent=11 // pred_region
          _
        $region20: #{resblock_forward.1} parent=11 // pred_fallthru
          _
        // Predicated region
        $region21: #{resblock_forward.1} parent=11 // pred_check
          %p216 = pneg %p146
        $region22: #{resblock_forward.1} parent=11 // pred_check_branch
          %218 = sbr.rel (%p216) target = $region24
        $region23: #{resblock_forward.1} parent=11 // pred_region
          _
        $region24: #{resblock_forward.1} parent=11 // pred_fallthru
          _
        // Predicated region
        $region25: #{resblock_forward.1} parent=11 // pred_check
          %p219 = pneg %p167
        $region26: #{resblock_forward.1} parent=11 // pred_check_branch
          %221 = sbr.rel (%p219) target = $region28
        $region27: #{resblock_forward.1} parent=11 // pred_region
          _
        $region28: #{resblock_forward.1} parent=11 // pred_fallthru
          _
      $region12: #{resblock_forward.1} parent=5 // pred_fallthru
        _
      %p222 = scmp.lt.s32.totalorder %s15, 4
      // Predicated region
      $region29: #{resblock_forward.1} parent=5 // pred_check
        %p223 = pneg %p222
      $region30: #{resblock_forward.1} parent=5 // pred_check_branch
        %225 = sbr.rel (%p223) target = $region32
      $region31: #{resblock_forward.1} parent=5 // pred_region
        // Predicated region
        $region33: #{resblock_forward.1} parent=31 // pred_check
          %p226 = pneg %p49
        $region34: #{resblock_forward.1} parent=31 // pred_check_branch
          %228 = sbr.rel (%p226) target = $region36
        $region35: #{resblock_forward.1} parent=31 // pred_region
          %p229 = scmp.lt.s32.totalorder %s22, 1
          %s230 = scalar_select %p229, %s22, 1
          %p231 = scmp.lt.s32.totalorder %s23, 1
          %s232 = scalar_select %p231, %s23, 1
          %s233 = smul.addr %s230, 2
          %s234 = sadd.s32 %s232, %s233
          %s235 = smul.addr %s234, 4
          %s236 = scalar_lea.vmem %s0, %s235
        $region36: #{resblock_forward.1} parent=31 // pred_fallthru
          _
        // Predicated region
        $region37: #{resblock_forward.1} parent=31 // pred_check
          %p237 = pneg %p77
        $region38: #{resblock_forward.1} parent=31 // pred_check_branch
          %239 = sbr.rel (%p237) target = $region40
        $region39: #{resblock_forward.1} parent=31 // pred_region
          %p240 = scmp.lt.s32.totalorder %s22, 1
          %s241 = scalar_select %p240, %s22, 1
          %p242 = scmp.lt.s32.totalorder %s23, 1
          %s243 = scalar_select %p242, %s23, 1
          %s244 = smul.addr %s241, 2
          %s245 = sadd.s32 %s243, %s244
          %s246 = smul.addr %s245, 4
          %s247 = scalar_lea.vmem %s1, %s246
        $region40: #{resblock_forward.1} parent=31 // pred_fallthru
          _
      $region32: #{resblock_forward.1} parent=5 // pred_fallthru
        _
      %p248 = scmp.le.s32.totalorder 1, %s15
      %p249 = scmp.lt.s32.totalorder %s15, 5
      %p250 = pnand %p248, %p249
      %p251 = pneg %p250
      // Predicated region
      $region41: #{resblock_forward.1} parent=5 // pred_check
        _
      $region42: #{resblock_forward.1} parent=5 // pred_check_branch
        %253 = sbr.rel (%p250) target = $region44
      $region43: #{resblock_forward.1} parent=5 // pred_region
        %s254 = ssub.s32 %s15, 1
        %p255 = scmp.lt.s32.totalorder %s24, 1
        %s256 = scalar_select %p255, %s24, 1
        %p257 = scmp.lt.s32.totalorder %s25, 1
        %s258 = scalar_select %p257, %s25, 1
        %s259 = smul.addr %s256, 2
        %s260 = sadd.s32 %s258, %s259
        %s261 = smul.addr %s260, 4
        %s262 = scalar_lea.vmem %s0, %s261
        %p263 = pneg %p55
        %p264 = pneg %p52
        %p265 = scmp.lt.s32.totalorder %s24, 1
        %s266 = scalar_select %p265, %s24, 1
        %p267 = scmp.lt.s32.totalorder %s25, 1
        %s268 = scalar_select %p267, %s25, 1
        %s269 = smul.addr %s266, 2
        %s270 = sadd.s32 %s268, %s269
        %s271 = smul.addr %s270, 4
        %s272 = scalar_lea.vmem %s1, %s271
        %p273 = pneg %p83
        %p274 = pneg %p80
        %p275 = pneg %p104
        %p276 = pneg %p101
        %p277 = pneg %p125
        %p278 = pneg %p122
        %p279 = pneg %p146
        %p280 = pneg %p143
        %p281 = pneg %p167
        %p282 = pneg %p164
        %p283 = pneg %p195
        %p284 = pneg %p192
        %s285 = sand.u32 %s182, 1
        %s286 = scalar_lea.sflag [#allocation4], %s285
        %s287 = sand.u32 %s182, 1
        %s288 = smul.addr %s287, 4
        %s289 = scalar_lea.vmem [#allocation3], %s288
        %p290 = scmp.lt.s32.totalorder %s24, 1
        %s291 = scalar_select %p290, %s24, 1
        %p292 = scmp.lt.s32.totalorder %s25, 1
        %s293 = scalar_select %p292, %s25, 1
        %s294 = smul.addr %s291, 2
        %s295 = sadd.s32 %s293, %s294
        %s296 = smul.addr %s295, 4
        %s297 = scalar_lea.vmem %s0, %s296
        %p298 = scmp.lt.s32.totalorder %s24, 1
        %s299 = scalar_select %p298, %s24, 1
        %p300 = scmp.lt.s32.totalorder %s25, 1
        %s301 = scalar_select %p300, %s25, 1
        %s302 = smul.addr %s299, 2
        %s303 = sadd.s32 %s301, %s302
        %s304 = smul.addr %s303, 4
        %s305 = scalar_lea.vmem %s1, %s304
        %v306 = vld [vmem:[%s305] sm:$0xf]
        %vm307 = vcmask 93184
        %308 = vst.msk [vmem:[#allocation2] sm:$0xf] %vm307, %v306
        %v309 = vld [vmem:[%s297] sm:$0xf]
        %311 = vrot.lane.b32.xlu0 %v309, 12
        %v312 = vpop.permute.xlu0 %311
        %v313 = vrot.slane %v312, 4
        %vm314 = vcmask 97280
        %v315 = vsel %vm314, %v313, %v312
        %vm317 = vcmask 1043552
        %vm318 = vcmask 97284
        %vm319 = vmor %vm318, %vm317
        %320 = vst.msk [vmem:[#allocation2] sm:$0xff] %vm319, %v315
        %v321 = vld [vmem:[%s305] sm:$0xf]
        %vm322 = vcmask 191584
        %323 = vst.msk [vmem:[#allocation2 + $0x4] sm:$0xf] %vm322, %v321
        %v324 = vld [vmem:[#allocation2] sm:$0xff]
        %vm325 = vcmp.ge.f32.partialorder %v324, 0.0
        %v326 = vmul.f32 %v324, 0.1
        %v327 = vsel %vm325, %v324, %v326
        %v328 = vld [vmem:[%s2] sm:$0xf]
        %s329 = scalar_lea.vmem %s2, 4
        %v330 = vld [vmem:[%s329] sm:$0xf]
        %332 = vst [vmem:[#allocation1] ss:$2 sm:$0xff] %v327
        %v333 = vld.sshfl [vmem:[#allocation1] sm:$0xff pattern:$0x75316420]
        %v334 = vld.sshfl [vmem:[#allocation1 + $0x8] sm:$0xff pattern:$0x75316420]
        %335 = vrot.lane.b32.xlu0 %v333, 127
        %v336 = vpop.permute.xlu0 %335
        %337 = vrot.lane.b32.xlu0 %v334, 127
        %v338 = vpop.permute.xlu0 %337
        %vm339 = vcmask 1039360
        %v340 = vsel %vm339, %v336, %v338
        %vm341 = vcmask 31744
        %v343 = vsel %vm341, %v330, 0
        %vm345 = vcmask 1043456
        %v346 = vsel %vm345, %v340, 0
        %v348 = vsel %vm345, %v338, 0
        %350 = vmatpush.msra.mxu0 0.0
        %351 = vmatpush.msra.mxu0 0.0
        %352 = vmatpush.msra.mxu0 0.0
        %353 = vmatpush.msra.mxu0 0.0
        %354 = vmatpush.msra.mxu0 0.0
        %355 = vmatpush.msra.mxu0 0.0
        %356 = vmatpush.msra.mxu0 0.0
        %357 = vmatpush.msra.mxu0 0.0
        %358 = vmatpush.msra.mxu0 0.0
        %359 = vmatpush.msra.mxu0 0.0
        %360 = vmatpush.msra.mxu0 0.0
        %361 = vmatpush.msra.mxu0 0.0
        %362 = vmatpush.msra.mxu0 0.0
        %363 = vmatpush.msra.mxu0 0.0
        %364 = vmatpush.msra.mxu0 0.0
        %365 = vmatpush.msra.mxu0 %v346
        %366 = vmatmul.f32.gmra.mxu0 %v343
        %v367 = vpop.f32.mrf.mxu0
        %v368 = vadd.f32 0.0, %v367
        %369 = vdwg.mxu0
        %370 = vmatpush.msra.mxu0 0.0
        %371 = vmatpush.msra.mxu0 0.0
        %372 = vmatpush.msra.mxu0 0.0
        %373 = vmatpush.msra.mxu0 0.0
        %374 = vmatpush.msra.mxu0 0.0
        %375 = vmatpush.msra.mxu0 0.0
        %376 = vmatpush.msra.mxu0 0.0
        %377 = vmatpush.msra.mxu0 0.0
        %378 = vmatpush.msra.mxu0 0.0
        %379 = vmatpush.msra.mxu0 0.0
        %380 = vmatpush.msra.mxu0 0.0
        %381 = vmatpush.msra.mxu0 0.0
        %382 = vmatpush.msra.mxu0 0.0
        %383 = vmatpush.msra.mxu0 0.0
        %384 = vmatpush.msra.mxu0 0.0
        %385 = vmatpush.msra.mxu0 %v348
        %386 = vmatmul.f32.gmra.mxu0 %v343
        %v387 = vpop.f32.mrf.mxu0
        %v388 = vadd.f32 0.0, %v387
        %389 = vdwg.mxu0
        %390 = vst [vmem:[#allocation1] ss:$2 sm:$0xff] %v327
        %v391 = vld.sshfl [vmem:[#allocation1] sm:$0xff pattern:$0x75316420]
        %v392 = vld.sshfl [vmem:[#allocation1 + $0x8] sm:$0xff pattern:$0x75316420]
        %v394 = vsel %vm341, %v328, 0
        %v396 = vsel %vm345, %v391, 0
        %v398 = vsel %vm345, %v392, 0
        %400 = vmatpush.msra.mxu0 0.0
        %401 = vmatpush.msra.mxu0 0.0
        %402 = vmatpush.msra.mxu0 0.0
        %403 = vmatpush.msra.mxu0 0.0
        %404 = vmatpush.msra.mxu0 0.0
        %405 = vmatpush.msra.mxu0 0.0
        %406 = vmatpush.msra.mxu0 0.0
        %407 = vmatpush.msra.mxu0 0.0
        %408 = vmatpush.msra.mxu0 0.0
        %409 = vmatpush.msra.mxu0 0.0
        %410 = vmatpush.msra.mxu0 0.0
        %411 = vmatpush.msra.mxu0 0.0
        %412 = vmatpush.msra.mxu0 0.0
        %413 = vmatpush.msra.mxu0 0.0
        %414 = vmatpush.msra.mxu0 0.0
        %415 = vmatpush.msra.mxu0 %v396
        %416 = vmatmul.f32.gmra.mxu0 %v394
        %v417 = vpop.f32.mrf.mxu0
        %v418 = vadd.f32 %v368, %v417
        %419 = vdwg.mxu0
        %420 = vmatpush.msra.mxu0 0.0
        %421 = vmatpush.msra.mxu0 0.0
        %422 = vmatpush.msra.mxu0 0.0
        %423 = vmatpush.msra.mxu0 0.0
        %424 = vmatpush.msra.mxu0 0.0
        %425 = vmatpush.msra.mxu0 0.0
        %426 = vmatpush.msra.mxu0 0.0
        %427 = vmatpush.msra.mxu0 0.0
        %428 = vmatpush.msra.mxu0 0.0
        %429 = vmatpush.msra.mxu0 0.0
        %430 = vmatpush.msra.mxu0 0.0
        %431 = vmatpush.msra.mxu0 0.0
        %432 = vmatpush.msra.mxu0 0.0
        %433 = vmatpush.msra.mxu0 0.0
        %434 = vmatpush.msra.mxu0 0.0
        %435 = vmatpush.msra.mxu0 %v398
        %436 = vmatmul.f32.gmra.mxu0 %v394
        %v437 = vpop.f32.mrf.mxu0
        %v438 = vadd.f32 %v388, %v437
        %439 = vdwg.mxu0
        %s440 = scalar_lea.vmem %s2, 8
        %v441 = vld [vmem:[%s440] sm:$0xf]
        %442 = vst [vmem:[#allocation1] ss:$2 sm:$0xff] %v327
        %v443 = vld.sshfl [vmem:[#allocation1] sm:$0xff pattern:$0x75316420]
        %v444 = vld.sshfl [vmem:[#allocation1 + $0x8] sm:$0xff pattern:$0x75316420]
        %445 = vrot.lane.b32.xlu0 %v443, 126
        %v446 = vpop.permute.xlu0 %445
        %447 = vrot.lane.b32.xlu0 %v444, 126
        %v448 = vpop.permute.xlu0 %447
        %vm449 = vcmask 1031168
        %v450 = vsel %vm449, %v446, %v448
        %v452 = vsel %vm341, %v441, 0
        %v454 = vsel %vm345, %v450, 0
        %v456 = vsel %vm345, %v448, 0
        %458 = vmatpush.msra.mxu0 0.0
        %459 = vmatpush.msra.mxu0 0.0
        %460 = vmatpush.msra.mxu0 0.0
        %461 = vmatpush.msra.mxu0 0.0
        %462 = vmatpush.msra.mxu0 0.0
        %463 = vmatpush.msra.mxu0 0.0
        %464 = vmatpush.msra.mxu0 0.0
        %465 = vmatpush.msra.mxu0 0.0
        %466 = vmatpush.msra.mxu0 0.0
        %467 = vmatpush.msra.mxu0 0.0
        %468 = vmatpush.msra.mxu0 0.0
        %469 = vmatpush.msra.mxu0 0.0
        %470 = vmatpush.msra.mxu0 0.0
        %471 = vmatpush.msra.mxu0 0.0
        %472 = vmatpush.msra.mxu0 0.0
        %473 = vmatpush.msra.mxu0 %v454
        %474 = vmatmul.f32.gmra.mxu0 %v452
        %v475 = vpop.f32.mrf.mxu0
        %v476 = vadd.f32 0.0, %v475
        %477 = vdwg.mxu0
        %478 = vmatpush.msra.mxu0 0.0
        %479 = vmatpush.msra.mxu0 0.0
        %480 = vmatpush.msra.mxu0 0.0
        %481 = vmatpush.msra.mxu0 0.0
        %482 = vmatpush.msra.mxu0 0.0
        %483 = vmatpush.msra.mxu0 0.0
        %484 = vmatpush.msra.mxu0 0.0
        %485 = vmatpush.msra.mxu0 0.0
        %486 = vmatpush.msra.mxu0 0.0
        %487 = vmatpush.msra.mxu0 0.0
        %488 = vmatpush.msra.mxu0 0.0
        %489 = vmatpush.msra.mxu0 0.0
        %490 = vmatpush.msra.mxu0 0.0
        %491 = vmatpush.msra.mxu0 0.0
        %492 = vmatpush.msra.mxu0 0.0
        %493 = vmatpush.msra.mxu0 %v456
        %494 = vmatmul.f32.gmra.mxu0 %v452
        %v495 = vpop.f32.mrf.mxu0
        %v496 = vadd.f32 0.0, %v495
        %497 = vdwg.mxu0
        %v498 = vadd.f32 %v418, %v476
        %v499 = vadd.f32 %v438, %v496
        %v500 = vld [vmem:[%s3] sm:$0xf]
        %502 = vset.pattern.permute.xlu0 0
        %503 = vperm.xlu0 %502, %v500
        %v504 = vpop.permute.xlu0 %503
        %v506 = vadd.f32 %v498, %v504
        %v507 = vadd.f32 %v499, %v504
        %s508 = smul.u32 %s25, 128
        %s509 = ssub.s32 %s508, 11
        %v510 = vlaneseq
        %v511 = vand.u32 %v510, 127
        %v512 = vadd.s32 %v511, 128
        %v513 = vstv %s509
        %v514 = vadd.s32 %v513, %v511
        %v515 = vadd.s32 %v513, %v512
        %vm516 = vcmp.ge.s32.totalorder %v514, 0
        %vm517 = vcmp.ge.s32.totalorder %v515, 0
        %vm518 = vcmp.lt.s32.totalorder %v514, 256
        %vm519 = vcmp.lt.s32.totalorder %v515, 256
        %vm520 = vmand %vm516, %vm518
        %vm521 = vmand %vm517, %vm519
        %v522 = vsel %vm520, 1, 0
        %v523 = vsel %vm521, 1, 0
        %vm524 = vcmp.eq.s32.totalorder %v522, 1
        %vm525 = vcmp.eq.s32.totalorder %v523, 1
        %v526 = vsel %vm524, %v506, 0.0
        %v527 = vsel %vm525, %v507, 0.0
        %vm528 = vcmp.ge.f32.partialorder %v526, 0.0
        %vm529 = vcmp.ge.f32.partialorder %v527, 0.0
        %v530 = vmul.f32 %v526, 0.1
        %v531 = vmul.f32 %v527, 0.1
        %v532 = vsel %vm528, %v526, %v530
        %v533 = vsel %vm529, %v527, %v531
        %v534 = vld [vmem:[%s5] sm:$0xf]
        %536 = vset.pattern.permute.xlu0 0
        %537 = vperm.xlu0 %536, %v534
        %v538 = vpop.permute.xlu0 %537
        %v540 = vunpack.c.l.s4 839922192
        %v541 = vunpack.c.0.s8 %v540
        %v542 = vperm.slane %v538, %v541
        %v544 = vadd.f32 %v324, %v542
        %v545 = vld [vmem:[%s4] sm:$0xf]
        %v547 = vsel %vm341, %v545, 0
        %v550 = vsel %vm345, %v532, 0
        %v553 = vsel %vm345, %v533, 0
        %555 = vmatpush.msra.mxu0 0.0
        %556 = vmatpush.msra.mxu0 0.0
        %557 = vmatpush.msra.mxu0 0.0
        %558 = vmatpush.msra.mxu0 0.0
        %559 = vmatpush.msra.mxu0 0.0
        %560 = vmatpush.msra.mxu0 0.0
        %561 = vmatpush.msra.mxu0 0.0
        %562 = vmatpush.msra.mxu0 0.0
        %563 = vmatpush.msra.mxu0 0.0
        %564 = vmatpush.msra.mxu0 0.0
        %565 = vmatpush.msra.mxu0 0.0
        %566 = vmatpush.msra.mxu0 0.0
        %567 = vmatpush.msra.mxu0 0.0
        %568 = vmatpush.msra.mxu0 0.0
        %569 = vmatpush.msra.mxu0 0.0
        %570 = vmatpush.msra.mxu0 %v550
        %571 = vmatmul.f32.gmra.mxu0 %v547
        %v572 = vpop.f32.mrf.mxu0
        %v573 = vadd.f32 0.0, %v572
        %574 = vdwg.mxu0
        %575 = vmatpush.msra.mxu0 0.0
        %576 = vmatpush.msra.mxu0 0.0
        %577 = vmatpush.msra.mxu0 0.0
        %578 = vmatpush.msra.mxu0 0.0
        %579 = vmatpush.msra.mxu0 0.0
        %580 = vmatpush.msra.mxu0 0.0
        %581 = vmatpush.msra.mxu0 0.0
        %582 = vmatpush.msra.mxu0 0.0
        %583 = vmatpush.msra.mxu0 0.0
        %584 = vmatpush.msra.mxu0 0.0
        %585 = vmatpush.msra.mxu0 0.0
        %586 = vmatpush.msra.mxu0 0.0
        %587 = vmatpush.msra.mxu0 0.0
        %588 = vmatpush.msra.mxu0 0.0
        %589 = vmatpush.msra.mxu0 0.0
        %590 = vmatpush.msra.mxu0 %v553
        %591 = vmatmul.f32.gmra.mxu0 %v547
        %v592 = vpop.f32.mrf.mxu0
        %v593 = vadd.f32 0.0, %v592
        %594 = vdwg.mxu0
        %v597 = vrot.slane %v593, 4
        %v598 = vsel %vm345, %v573, %v597
        %599 = vrot.lane.b32.xlu0 %v598, 2
        %v600 = vpop.permute.xlu0 %599
        %v601 = vrot.slane %v600, 4
        %vm602 = vcmask 15360
        %v603 = vsel %vm602, %v601, %v600
        %v605 = vadd.f32 %v544, %v603
        %s606 = scalar_lea.vmem %s4, 4
        %v607 = vld [vmem:[%s606] sm:$0xf]
        %608 = vrot.lane.b32.xlu0 %v532, 127
        %v609 = vpop.permute.xlu0 %608
        %610 = vrot.lane.b32.xlu0 %v533, 127
        %v611 = vpop.permute.xlu0 %610
        %v612 = vsel %vm339, %v609, %v611
        %v614 = vsel %vm341, %v607, 0
        %v616 = vsel %vm345, %v612, 0
        %v618 = vsel %vm345, %v611, 0
        %620 = vmatpush.msra.mxu0 0.0
        %621 = vmatpush.msra.mxu0 0.0
        %622 = vmatpush.msra.mxu0 0.0
        %623 = vmatpush.msra.mxu0 0.0
        %624 = vmatpush.msra.mxu0 0.0
        %625 = vmatpush.msra.mxu0 0.0
        %626 = vmatpush.msra.mxu0 0.0
        %627 = vmatpush.msra.mxu0 0.0
        %628 = vmatpush.msra.mxu0 0.0
        %629 = vmatpush.msra.mxu0 0.0
        %630 = vmatpush.msra.mxu0 0.0
        %631 = vmatpush.msra.mxu0 0.0
        %632 = vmatpush.msra.mxu0 0.0
        %633 = vmatpush.msra.mxu0 0.0
        %634 = vmatpush.msra.mxu0 0.0
        %635 = vmatpush.msra.mxu0 %v616
        %636 = vmatmul.f32.gmra.mxu0 %v614
        %v637 = vpop.f32.mrf.mxu0
        %v638 = vadd.f32 0.0, %v637
        %639 = vdwg.mxu0
        %640 = vmatpush.msra.mxu0 0.0
        %641 = vmatpush.msra.mxu0 0.0
        %642 = vmatpush.msra.mxu0 0.0
        %643 = vmatpush.msra.mxu0 0.0
        %644 = vmatpush.msra.mxu0 0.0
        %645 = vmatpush.msra.mxu0 0.0
        %646 = vmatpush.msra.mxu0 0.0
        %647 = vmatpush.msra.mxu0 0.0
        %648 = vmatpush.msra.mxu0 0.0
        %649 = vmatpush.msra.mxu0 0.0
        %650 = vmatpush.msra.mxu0 0.0
        %651 = vmatpush.msra.mxu0 0.0
        %652 = vmatpush.msra.mxu0 0.0
        %653 = vmatpush.msra.mxu0 0.0
        %654 = vmatpush.msra.mxu0 0.0
        %655 = vmatpush.msra.mxu0 %v618
        %656 = vmatmul.f32.gmra.mxu0 %v614
        %v657 = vpop.f32.mrf.mxu0
        %v658 = vadd.f32 0.0, %v657
        %659 = vdwg.mxu0
        %v662 = vrot.slane %v658, 4
        %v663 = vsel %vm345, %v638, %v662
        %664 = vrot.lane.b32.xlu0 %v663, 2
        %v665 = vpop.permute.xlu0 %664
        %v666 = vrot.slane %v665, 4
        %v667 = vsel %vm602, %v666, %v665
        %v669 = vadd.f32 %v605, %v667
        %s670 = scalar_lea.vmem %s4, 8
        %v671 = vld [vmem:[%s670] sm:$0xf]
        %672 = vrot.lane.b32.xlu0 %v532, 126
        %v673 = vpop.permute.xlu0 %672
        %674 = vrot.lane.b32.xlu0 %v533, 126
        %v675 = vpop.permute.xlu0 %674
        %v676 = vsel %vm449, %v673, %v675
        %v678 = vsel %vm341, %v671, 0
        %v680 = vsel %vm345, %v676, 0
        %v682 = vsel %vm345, %v675, 0
        %684 = vmatpush.msra.mxu0 0.0
        %685 = vmatpush.msra.mxu0 0.0
        %686 = vmatpush.msra.mxu0 0.0
        %687 = vmatpush.msra.mxu0 0.0
        %688 = vmatpush.msra.mxu0 0.0
        %689 = vmatpush.msra.mxu0 0.0
        %690 = vmatpush.msra.mxu0 0.0
        %691 = vmatpush.msra.mxu0 0.0
        %692 = vmatpush.msra.mxu0 0.0
        %693 = vmatpush.msra.mxu0 0.0
        %694 = vmatpush.msra.mxu0 0.0
        %695 = vmatpush.msra.mxu0 0.0
        %696 = vmatpush.msra.mxu0 0.0
        %697 = vmatpush.msra.mxu0 0.0
        %698 = vmatpush.msra.mxu0 0.0
        %699 = vmatpush.msra.mxu0 %v680
        %700 = vmatmul.f32.gmra.mxu0 %v678
        %v701 = vpop.f32.mrf.mxu0
        %v702 = vadd.f32 0.0, %v701
        %703 = vdwg.mxu0
        %704 = vmatpush.msra.mxu0 0.0
        %705 = vmatpush.msra.mxu0 0.0
        %706 = vmatpush.msra.mxu0 0.0
        %707 = vmatpush.msra.mxu0 0.0
        %708 = vmatpush.msra.mxu0 0.0
        %709 = vmatpush.msra.mxu0 0.0
        %710 = vmatpush.msra.mxu0 0.0
        %711 = vmatpush.msra.mxu0 0.0
        %712 = vmatpush.msra.mxu0 0.0
        %713 = vmatpush.msra.mxu0 0.0
        %714 = vmatpush.msra.mxu0 0.0
        %715 = vmatpush.msra.mxu0 0.0
        %716 = vmatpush.msra.mxu0 0.0
        %717 = vmatpush.msra.mxu0 0.0
        %718 = vmatpush.msra.mxu0 0.0
        %719 = vmatpush.msra.mxu0 %v682
        %720 = vmatmul.f32.gmra.mxu0 %v678
        %v721 = vpop.f32.mrf.mxu0
        %v722 = vadd.f32 0.0, %v721
        %723 = vdwg.mxu0
        %v726 = vrot.slane %v722, 4
        %v727 = vsel %vm345, %v702, %v726
        %728 = vrot.lane.b32.xlu0 %v727, 2
        %v729 = vpop.permute.xlu0 %728
        %v730 = vrot.slane %v729, 4
        %v731 = vsel %vm602, %v730, %v729
        %v733 = vadd.f32 %v669, %v731
        %s734 = ssub.s32 %s508, 10
        %v735 = vstv %s734
        %v736 = vadd.s32 %v735, %v511
        %v737 = vadd.s32 %v735, %v512
        %vm738 = vcmp.ge.s32.totalorder %v736, 0
        %vm739 = vcmp.ge.s32.totalorder %v737, 0
        %vm740 = vcmp.lt.s32.totalorder %v736, 256
        %vm741 = vcmp.lt.s32.totalorder %v737, 256
        %vm742 = vmand %vm738, %vm740
        %vm743 = vmand %vm739, %vm741
        %v744 = vsel %vm742, 1, 0
        %v745 = vsel %vm743, 1, 0
        %vm746 = vcmp.eq.s32.totalorder %v744, 1
        %vm747 = vcmp.eq.s32.totalorder %v745, 1
        %749 = vst [vmem:[#allocation1] ss:$2 sm:$0xff] %v733
        %v750 = vld.sshfl [vmem:[#allocation1] sm:$0xff pattern:$0x75316420]
        %v751 = vld.sshfl [vmem:[#allocation1 + $0x8] sm:$0xff pattern:$0x75316420]
        %752 = vrot.lane.b32.xlu0 %v750, 126
        %v753 = vpop.permute.xlu0 %752
        %754 = vrot.lane.b32.xlu0 %v751, 126
        %v755 = vpop.permute.xlu0 %754
        %v756 = vsel %vm449, %v753, %v755
        %v759 = vsel %vm746, %v756, 0.0
        %v760 = vsel %vm747, %v755, 0.0
        %vm761 = vcmp.ge.f32.partialorder %v759, 0.0
        %vm762 = vcmp.ge.f32.partialorder %v760, 0.0
        %v763 = vmul.f32 %v759, 0.1
        %v764 = vmul.f32 %v760, 0.1
        %v765 = vsel %vm761, %v759, %v763
        %v766 = vsel %vm762, %v760, %v764
        %s767 = scalar_lea.vmem %s2, 12
        %v768 = vld [vmem:[%s767] sm:$0xf]
        %s769 = scalar_lea.vmem %s2, 16
        %v770 = vld [vmem:[%s769] sm:$0xf]
        %773 = vrot.lane.b32.xlu0 %v765, 125
        %v774 = vpop.permute.xlu0 %773
        %775 = vrot.lane.b32.xlu0 %v766, 125
        %v776 = vpop.permute.xlu0 %775
        %vm777 = vcmask 1022976
        %v778 = vsel %vm777, %v774, %v776
        %v780 = vsel %vm341, %v770, 0
        %v782 = vsel %vm345, %v778, 0
        %v784 = vsel %vm345, %v776, 0
        %786 = vmatpush.msra.mxu0 0.0
        %787 = vmatpush.msra.mxu0 0.0
        %788 = vmatpush.msra.mxu0 0.0
        %789 = vmatpush.msra.mxu0 0.0
        %790 = vmatpush.msra.mxu0 0.0
        %791 = vmatpush.msra.mxu0 0.0
        %792 = vmatpush.msra.mxu0 0.0
        %793 = vmatpush.msra.mxu0 0.0
        %794 = vmatpush.msra.mxu0 0.0
        %795 = vmatpush.msra.mxu0 0.0
        %796 = vmatpush.msra.mxu0 0.0
        %797 = vmatpush.msra.mxu0 0.0
        %798 = vmatpush.msra.mxu0 0.0
        %799 = vmatpush.msra.mxu0 0.0
        %800 = vmatpush.msra.mxu0 0.0
        %801 = vmatpush.msra.mxu0 %v782
        %802 = vmatmul.f32.gmra.mxu0 %v780
        %v803 = vpop.f32.mrf.mxu0
        %v804 = vadd.f32 0.0, %v803
        %805 = vdwg.mxu0
        %806 = vmatpush.msra.mxu0 0.0
        %807 = vmatpush.msra.mxu0 0.0
        %808 = vmatpush.msra.mxu0 0.0
        %809 = vmatpush.msra.mxu0 0.0
        %810 = vmatpush.msra.mxu0 0.0
        %811 = vmatpush.msra.mxu0 0.0
        %812 = vmatpush.msra.mxu0 0.0
        %813 = vmatpush.msra.mxu0 0.0
        %814 = vmatpush.msra.mxu0 0.0
        %815 = vmatpush.msra.mxu0 0.0
        %816 = vmatpush.msra.mxu0 0.0
        %817 = vmatpush.msra.mxu0 0.0
        %818 = vmatpush.msra.mxu0 0.0
        %819 = vmatpush.msra.mxu0 0.0
        %820 = vmatpush.msra.mxu0 0.0
        %821 = vmatpush.msra.mxu0 %v784
        %822 = vmatmul.f32.gmra.mxu0 %v780
        %v823 = vpop.f32.mrf.mxu0
        %v824 = vadd.f32 0.0, %v823
        %825 = vdwg.mxu0
        %v827 = vsel %vm341, %v768, 0
        %v829 = vsel %vm345, %v765, 0
        %v831 = vsel %vm345, %v766, 0
        %833 = vmatpush.msra.mxu0 0.0
        %834 = vmatpush.msra.mxu0 0.0
        %835 = vmatpush.msra.mxu0 0.0
        %836 = vmatpush.msra.mxu0 0.0
        %837 = vmatpush.msra.mxu0 0.0
        %838 = vmatpush.msra.mxu0 0.0
        %839 = vmatpush.msra.mxu0 0.0
        %840 = vmatpush.msra.mxu0 0.0
        %841 = vmatpush.msra.mxu0 0.0
        %842 = vmatpush.msra.mxu0 0.0
        %843 = vmatpush.msra.mxu0 0.0
        %844 = vmatpush.msra.mxu0 0.0
        %845 = vmatpush.msra.mxu0 0.0
        %846 = vmatpush.msra.mxu0 0.0
        %847 = vmatpush.msra.mxu0 0.0
        %848 = vmatpush.msra.mxu0 %v829
        %849 = vmatmul.f32.gmra.mxu0 %v827
        %v850 = vpop.f32.mrf.mxu0
        %v851 = vadd.f32 %v804, %v850
        %852 = vdwg.mxu0
        %853 = vmatpush.msra.mxu0 0.0
        %854 = vmatpush.msra.mxu0 0.0
        %855 = vmatpush.msra.mxu0 0.0
        %856 = vmatpush.msra.mxu0 0.0
        %857 = vmatpush.msra.mxu0 0.0
        %858 = vmatpush.msra.mxu0 0.0
        %859 = vmatpush.msra.mxu0 0.0
        %860 = vmatpush.msra.mxu0 0.0
        %861 = vmatpush.msra.mxu0 0.0
        %862 = vmatpush.msra.mxu0 0.0
        %863 = vmatpush.msra.mxu0 0.0
        %864 = vmatpush.msra.mxu0 0.0
        %865 = vmatpush.msra.mxu0 0.0
        %866 = vmatpush.msra.mxu0 0.0
        %867 = vmatpush.msra.mxu0 0.0
        %868 = vmatpush.msra.mxu0 %v831
        %869 = vmatmul.f32.gmra.mxu0 %v827
        %v870 = vpop.f32.mrf.mxu0
        %v871 = vadd.f32 %v824, %v870
        %872 = vdwg.mxu0
        %s873 = scalar_lea.vmem %s2, 20
        %v874 = vld [vmem:[%s873] sm:$0xf]
        %875 = vrot.lane.b32.xlu0 %v765, 122
        %v876 = vpop.permute.xlu0 %875
        %877 = vrot.lane.b32.xlu0 %v766, 122
        %v878 = vpop.permute.xlu0 %877
        %vm879 = vcmask 998400
        %v880 = vsel %vm879, %v876, %v878
        %v882 = vsel %vm341, %v874, 0
        %v884 = vsel %vm345, %v880, 0
        %v886 = vsel %vm345, %v878, 0
        %888 = vmatpush.msra.mxu0 0.0
        %889 = vmatpush.msra.mxu0 0.0
        %890 = vmatpush.msra.mxu0 0.0
        %891 = vmatpush.msra.mxu0 0.0
        %892 = vmatpush.msra.mxu0 0.0
        %893 = vmatpush.msra.mxu0 0.0
        %894 = vmatpush.msra.mxu0 0.0
        %895 = vmatpush.msra.mxu0 0.0
        %896 = vmatpush.msra.mxu0 0.0
        %897 = vmatpush.msra.mxu0 0.0
        %898 = vmatpush.msra.mxu0 0.0
        %899 = vmatpush.msra.mxu0 0.0
        %900 = vmatpush.msra.mxu0 0.0
        %901 = vmatpush.msra.mxu0 0.0
        %902 = vmatpush.msra.mxu0 0.0
        %903 = vmatpush.msra.mxu0 %v884
        %904 = vmatmul.f32.gmra.mxu0 %v882
        %v905 = vpop.f32.mrf.mxu0
        %v906 = vadd.f32 0.0, %v905
        %907 = vdwg.mxu0
        %908 = vmatpush.msra.mxu0 0.0
        %909 = vmatpush.msra.mxu0 0.0
        %910 = vmatpush.msra.mxu0 0.0
        %911 = vmatpush.msra.mxu0 0.0
        %912 = vmatpush.msra.mxu0 0.0
        %913 = vmatpush.msra.mxu0 0.0
        %914 = vmatpush.msra.mxu0 0.0
        %915 = vmatpush.msra.mxu0 0.0
        %916 = vmatpush.msra.mxu0 0.0
        %917 = vmatpush.msra.mxu0 0.0
        %918 = vmatpush.msra.mxu0 0.0
        %919 = vmatpush.msra.mxu0 0.0
        %920 = vmatpush.msra.mxu0 0.0
        %921 = vmatpush.msra.mxu0 0.0
        %922 = vmatpush.msra.mxu0 0.0
        %923 = vmatpush.msra.mxu0 %v886
        %924 = vmatmul.f32.gmra.mxu0 %v882
        %v925 = vpop.f32.mrf.mxu0
        %v926 = vadd.f32 0.0, %v925
        %927 = vdwg.mxu0
        %v928 = vadd.f32 %v851, %v906
        %v929 = vadd.f32 %v871, %v926
        %s930 = scalar_lea.vmem %s3, 4
        %v931 = vld [vmem:[%s930] sm:$0xf]
        %933 = vset.pattern.permute.xlu0 0
        %934 = vperm.xlu0 %933, %v931
        %v935 = vpop.permute.xlu0 %934
        %v937 = vadd.f32 %v928, %v935
        %v938 = vadd.f32 %v929, %v935
        %s939 = ssub.s32 %s508, 7
        %v940 = vstv %s939
        %v941 = vadd.s32 %v940, %v511
        %v942 = vadd.s32 %v940, %v512
        %vm943 = vcmp.ge.s32.totalorder %v941, 0
        %vm944 = vcmp.ge.s32.totalorder %v942, 0
        %vm945 = vcmp.lt.s32.totalorder %v941, 256
        %vm946 = vcmp.lt.s32.totalorder %v942, 256
        %vm947 = vmand %vm943, %vm945
        %vm948 = vmand %vm944, %vm946
        %v949 = vsel %vm947, 1, 0
        %v950 = vsel %vm948, 1, 0
        %vm951 = vcmp.eq.s32.totalorder %v949, 1
        %vm952 = vcmp.eq.s32.totalorder %v950, 1
        %v953 = vsel %vm951, %v937, 0.0
        %v954 = vsel %vm952, %v938, 0.0
        %vm955 = vcmp.ge.f32.partialorder %v953, 0.0
        %vm956 = vcmp.ge.f32.partialorder %v954, 0.0
        %v957 = vmul.f32 %v953, 0.1
        %v958 = vmul.f32 %v954, 0.1
        %v959 = vsel %vm955, %v953, %v957
        %v960 = vsel %vm956, %v954, %v958
        %s961 = scalar_lea.vmem %s5, 4
        %v962 = vld [vmem:[%s961] sm:$0xf]
        %964 = vset.pattern.permute.xlu0 0
        %965 = vperm.xlu0 %964, %v962
        %v966 = vpop.permute.xlu0 %965
        %v968 = vadd.f32 %v759, %v966
        %v969 = vadd.f32 %v760, %v966
        %s970 = scalar_lea.vmem %s4, 12
        %v971 = vld [vmem:[%s970] sm:$0xf]
        %v973 = vsel %vm341, %v971, 0
        %v976 = vsel %vm345, %v959, 0
        %v979 = vsel %vm345, %v960, 0
        %981 = vmatpush.msra.mxu0 0.0
        %982 = vmatpush.msra.mxu0 0.0
        %983 = vmatpush.msra.mxu0 0.0
        %984 = vmatpush.msra.mxu0 0.0
        %985 = vmatpush.msra.mxu0 0.0
        %986 = vmatpush.msra.mxu0 0.0
        %987 = vmatpush.msra.mxu0 0.0
        %988 = vmatpush.msra.mxu0 0.0
        %989 = vmatpush.msra.mxu0 0.0
        %990 = vmatpush.msra.mxu0 0.0
        %991 = vmatpush.msra.mxu0 0.0
        %992 = vmatpush.msra.mxu0 0.0
        %993 = vmatpush.msra.mxu0 0.0
        %994 = vmatpush.msra.mxu0 0.0
        %995 = vmatpush.msra.mxu0 0.0
        %996 = vmatpush.msra.mxu0 %v976
        %997 = vmatmul.f32.gmra.mxu0 %v973
        %v998 = vpop.f32.mrf.mxu0
        %v999 = vadd.f32 0.0, %v998
        %1000 = vdwg.mxu0
        %1001 = vmatpush.msra.mxu0 0.0
        %1002 = vmatpush.msra.mxu0 0.0
        %1003 = vmatpush.msra.mxu0 0.0
        %1004 = vmatpush.msra.mxu0 0.0
        %1005 = vmatpush.msra.mxu0 0.0
        %1006 = vmatpush.msra.mxu0 0.0
        %1007 = vmatpush.msra.mxu0 0.0
        %1008 = vmatpush.msra.mxu0 0.0
        %1009 = vmatpush.msra.mxu0 0.0
        %1010 = vmatpush.msra.mxu0 0.0
        %1011 = vmatpush.msra.mxu0 0.0
        %1012 = vmatpush.msra.mxu0 0.0
        %1013 = vmatpush.msra.mxu0 0.0
        %1014 = vmatpush.msra.mxu0 0.0
        %1015 = vmatpush.msra.mxu0 0.0
        %1016 = vmatpush.msra.mxu0 %v979
        %1017 = vmatmul.f32.gmra.mxu0 %v973
        %v1018 = vpop.f32.mrf.mxu0
        %v1019 = vadd.f32 0.0, %v1018
        %1020 = vdwg.mxu0
        %1023 = vrot.lane.b32.xlu0 %v999, 4
        %v1024 = vpop.permute.xlu0 %1023
        %1025 = vrot.lane.b32.xlu0 %v1019, 4
        %v1026 = vpop.permute.xlu0 %1025
        %v1027 = vsel %vm341, %v1024, %v1026
        %v1030 = vadd.f32 %v968, %v1024
        %v1031 = vadd.f32 %v969, %v1027
        %s1032 = scalar_lea.vmem %s4, 16
        %v1033 = vld [vmem:[%s1032] sm:$0xf]
        %1034 = vrot.lane.b32.xlu0 %v959, 127
        %v1035 = vpop.permute.xlu0 %1034
        %1036 = vrot.lane.b32.xlu0 %v960, 127
        %v1037 = vpop.permute.xlu0 %1036
        %v1038 = vsel %vm339, %v1035, %v1037
        %v1040 = vsel %vm341, %v1033, 0
        %v1042 = vsel %vm345, %v1038, 0
        %v1044 = vsel %vm345, %v1037, 0
        %1046 = vmatpush.msra.mxu0 0.0
        %1047 = vmatpush.msra.mxu0 0.0
        %1048 = vmatpush.msra.mxu0 0.0
        %1049 = vmatpush.msra.mxu0 0.0
        %1050 = vmatpush.msra.mxu0 0.0
        %1051 = vmatpush.msra.mxu0 0.0
        %1052 = vmatpush.msra.mxu0 0.0
        %1053 = vmatpush.msra.mxu0 0.0
        %1054 = vmatpush.msra.mxu0 0.0
        %1055 = vmatpush.msra.mxu0 0.0
        %1056 = vmatpush.msra.mxu0 0.0
        %1057 = vmatpush.msra.mxu0 0.0
        %1058 = vmatpush.msra.mxu0 0.0
        %1059 = vmatpush.msra.mxu0 0.0
        %1060 = vmatpush.msra.mxu0 0.0
        %1061 = vmatpush.msra.mxu0 %v1042
        %1062 = vmatmul.f32.gmra.mxu0 %v1040
        %v1063 = vpop.f32.mrf.mxu0
        %v1064 = vadd.f32 0.0, %v1063
        %1065 = vdwg.mxu0
        %1066 = vmatpush.msra.mxu0 0.0
        %1067 = vmatpush.msra.mxu0 0.0
        %1068 = vmatpush.msra.mxu0 0.0
        %1069 = vmatpush.msra.mxu0 0.0
        %1070 = vmatpush.msra.mxu0 0.0
        %1071 = vmatpush.msra.mxu0 0.0
        %1072 = vmatpush.msra.mxu0 0.0
        %1073 = vmatpush.msra.mxu0 0.0
        %1074 = vmatpush.msra.mxu0 0.0
        %1075 = vmatpush.msra.mxu0 0.0
        %1076 = vmatpush.msra.mxu0 0.0
        %1077 = vmatpush.msra.mxu0 0.0
        %1078 = vmatpush.msra.mxu0 0.0
        %1079 = vmatpush.msra.mxu0 0.0
        %1080 = vmatpush.msra.mxu0 0.0
        %1081 = vmatpush.msra.mxu0 %v1044
        %1082 = vmatmul.f32.gmra.mxu0 %v1040
        %v1083 = vpop.f32.mrf.mxu0
        %v1084 = vadd.f32 0.0, %v1083
        %1085 = vdwg.mxu0
        %1088 = vrot.lane.b32.xlu0 %v1064, 4
        %v1089 = vpop.permute.xlu0 %1088
        %1090 = vrot.lane.b32.xlu0 %v1084, 4
        %v1091 = vpop.permute.xlu0 %1090
        %v1092 = vsel %vm341, %v1089, %v1091
        %v1095 = vadd.f32 %v1030, %v1089
        %v1096 = vadd.f32 %v1031, %v1092
        %s1097 = scalar_lea.vmem %s4, 20
        %v1098 = vld [vmem:[%s1097] sm:$0xf]
        %1099 = vrot.lane.b32.xlu0 %v959, 126
        %v1100 = vpop.permute.xlu0 %1099
        %1101 = vrot.lane.b32.xlu0 %v960, 126
        %v1102 = vpop.permute.xlu0 %1101
        %v1103 = vsel %vm449, %v1100, %v1102
        %v1105 = vsel %vm341, %v1098, 0
        %v1107 = vsel %vm345, %v1103, 0
        %v1109 = vsel %vm345, %v1102, 0
        %1111 = vmatpush.msra.mxu0 0.0
        %1112 = vmatpush.msra.mxu0 0.0
        %1113 = vmatpush.msra.mxu0 0.0
        %1114 = vmatpush.msra.mxu0 0.0
        %1115 = vmatpush.msra.mxu0 0.0
        %1116 = vmatpush.msra.mxu0 0.0
        %1117 = vmatpush.msra.mxu0 0.0
        %1118 = vmatpush.msra.mxu0 0.0
        %1119 = vmatpush.msra.mxu0 0.0
        %1120 = vmatpush.msra.mxu0 0.0
        %1121 = vmatpush.msra.mxu0 0.0
        %1122 = vmatpush.msra.mxu0 0.0
        %1123 = vmatpush.msra.mxu0 0.0
        %1124 = vmatpush.msra.mxu0 0.0
        %1125 = vmatpush.msra.mxu0 0.0
        %1126 = vmatpush.msra.mxu0 %v1107
        %1127 = vmatmul.f32.gmra.mxu0 %v1105
        %v1128 = vpop.f32.mrf.mxu0
        %v1129 = vadd.f32 0.0, %v1128
        %1130 = vdwg.mxu0
        %1131 = vmatpush.msra.mxu0 0.0
        %1132 = vmatpush.msra.mxu0 0.0
        %1133 = vmatpush.msra.mxu0 0.0
        %1134 = vmatpush.msra.mxu0 0.0
        %1135 = vmatpush.msra.mxu0 0.0
        %1136 = vmatpush.msra.mxu0 0.0
        %1137 = vmatpush.msra.mxu0 0.0
        %1138 = vmatpush.msra.mxu0 0.0
        %1139 = vmatpush.msra.mxu0 0.0
        %1140 = vmatpush.msra.mxu0 0.0
        %1141 = vmatpush.msra.mxu0 0.0
        %1142 = vmatpush.msra.mxu0 0.0
        %1143 = vmatpush.msra.mxu0 0.0
        %1144 = vmatpush.msra.mxu0 0.0
        %1145 = vmatpush.msra.mxu0 0.0
        %1146 = vmatpush.msra.mxu0 %v1109
        %1147 = vmatmul.f32.gmra.mxu0 %v1105
        %v1148 = vpop.f32.mrf.mxu0
        %v1149 = vadd.f32 0.0, %v1148
        %1150 = vdwg.mxu0
        %1153 = vrot.lane.b32.xlu0 %v1129, 4
        %v1154 = vpop.permute.xlu0 %1153
        %1155 = vrot.lane.b32.xlu0 %v1149, 4
        %v1156 = vpop.permute.xlu0 %1155
        %v1157 = vsel %vm341, %v1154, %v1156
        %v1160 = vadd.f32 %v1095, %v1154
        %v1161 = vadd.f32 %v1096, %v1157
        %s1162 = ssub.s32 %s508, 6
        %v1163 = vstv %s1162
        %v1164 = vadd.s32 %v1163, %v511
        %v1165 = vadd.s32 %v1163, %v512
        %vm1166 = vcmp.ge.s32.totalorder %v1164, 0
        %vm1167 = vcmp.ge.s32.totalorder %v1165, 0
        %vm1168 = vcmp.lt.s32.totalorder %v1164, 256
        %vm1169 = vcmp.lt.s32.totalorder %v1165, 256
        %vm1170 = vmand %vm1166, %vm1168
        %vm1171 = vmand %vm1167, %vm1169
        %v1172 = vsel %vm1170, 1, 0
        %v1173 = vsel %vm1171, 1, 0
        %vm1174 = vcmp.eq.s32.totalorder %v1172, 1
        %vm1175 = vcmp.eq.s32.totalorder %v1173, 1
        %1178 = vrot.lane.b32.xlu0 %v1160, 124
        %v1179 = vpop.permute.xlu0 %1178
        %1180 = vrot.lane.b32.xlu0 %v1161, 124
        %v1181 = vpop.permute.xlu0 %1180
        %vm1182 = vcmask 1014784
        %v1183 = vsel %vm1182, %v1179, %v1181
        %v1186 = vsel %vm1174, %v1183, 0.0
        %v1187 = vsel %vm1175, %v1181, 0.0
        %vm1188 = vcmp.ge.f32.partialorder %v1186, 0.0
        %vm1189 = vcmp.ge.f32.partialorder %v1187, 0.0
        %v1190 = vmul.f32 %v1186, 0.1
        %v1191 = vmul.f32 %v1187, 0.1
        %v1192 = vsel %vm1188, %v1186, %v1190
        %v1193 = vsel %vm1189, %v1187, %v1191
        %s1194 = scalar_lea.vmem %s2, 24
        %v1195 = vld [vmem:[%s1194] sm:$0xf]
        %s1196 = scalar_lea.vmem %s2, 28
        %v1197 = vld [vmem:[%s1196] sm:$0xf]
        %1200 = vrot.lane.b32.xlu0 %v1192, 123
        %v1201 = vpop.permute.xlu0 %1200
        %1202 = vrot.lane.b32.xlu0 %v1193, 123
        %v1203 = vpop.permute.xlu0 %1202
        %vm1204 = vcmask 1006592
        %v1205 = vsel %vm1204, %v1201, %v1203
        %v1207 = vsel %vm341, %v1197, 0
        %v1209 = vsel %vm345, %v1205, 0
        %v1211 = vsel %vm345, %v1203, 0
        %1213 = vmatpush.msra.mxu0 0.0
        %1214 = vmatpush.msra.mxu0 0.0
        %1215 = vmatpush.msra.mxu0 0.0
        %1216 = vmatpush.msra.mxu0 0.0
        %1217 = vmatpush.msra.mxu0 0.0
        %1218 = vmatpush.msra.mxu0 0.0
        %1219 = vmatpush.msra.mxu0 0.0
        %1220 = vmatpush.msra.mxu0 0.0
        %1221 = vmatpush.msra.mxu0 0.0
        %1222 = vmatpush.msra.mxu0 0.0
        %1223 = vmatpush.msra.mxu0 0.0
        %1224 = vmatpush.msra.mxu0 0.0
        %1225 = vmatpush.msra.mxu0 0.0
        %1226 = vmatpush.msra.mxu0 0.0
        %1227 = vmatpush.msra.mxu0 0.0
        %1228 = vmatpush.msra.mxu0 %v1209
        %1229 = vmatmul.f32.gmra.mxu0 %v1207
        %v1230 = vpop.f32.mrf.mxu0
        %v1231 = vadd.f32 0.0, %v1230
        %1232 = vdwg.mxu0
        %1233 = vmatpush.msra.mxu0 0.0
        %1234 = vmatpush.msra.mxu0 0.0
        %1235 = vmatpush.msra.mxu0 0.0
        %1236 = vmatpush.msra.mxu0 0.0
        %1237 = vmatpush.msra.mxu0 0.0
        %1238 = vmatpush.msra.mxu0 0.0
        %1239 = vmatpush.msra.mxu0 0.0
        %1240 = vmatpush.msra.mxu0 0.0
        %1241 = vmatpush.msra.mxu0 0.0
        %1242 = vmatpush.msra.mxu0 0.0
        %1243 = vmatpush.msra.mxu0 0.0
        %1244 = vmatpush.msra.mxu0 0.0
        %1245 = vmatpush.msra.mxu0 0.0
        %1246 = vmatpush.msra.mxu0 0.0
        %1247 = vmatpush.msra.mxu0 0.0
        %1248 = vmatpush.msra.mxu0 %v1211
        %1249 = vmatmul.f32.gmra.mxu0 %v1207
        %v1250 = vpop.f32.mrf.mxu0
        %v1251 = vadd.f32 0.0, %v1250
        %1252 = vdwg.mxu0
        %v1254 = vsel %vm341, %v1195, 0
        %v1256 = vsel %vm345, %v1192, 0
        %v1258 = vsel %vm345, %v1193, 0
        %1260 = vmatpush.msra.mxu0 0.0
        %1261 = vmatpush.msra.mxu0 0.0
        %1262 = vmatpush.msra.mxu0 0.0
        %1263 = vmatpush.msra.mxu0 0.0
        %1264 = vmatpush.msra.mxu0 0.0
        %1265 = vmatpush.msra.mxu0 0.0
        %1266 = vmatpush.msra.mxu0 0.0
        %1267 = vmatpush.msra.mxu0 0.0
        %1268 = vmatpush.msra.mxu0 0.0
        %1269 = vmatpush.msra.mxu0 0.0
        %1270 = vmatpush.msra.mxu0 0.0
        %1271 = vmatpush.msra.mxu0 0.0
        %1272 = vmatpush.msra.mxu0 0.0
        %1273 = vmatpush.msra.mxu0 0.0
        %1274 = vmatpush.msra.mxu0 0.0
        %1275 = vmatpush.msra.mxu0 %v1256
        %1276 = vmatmul.f32.gmra.mxu0 %v1254
        %v1277 = vpop.f32.mrf.mxu0
        %v1278 = vadd.f32 %v1231, %v1277
        %1279 = vdwg.mxu0
        %1280 = vmatpush.msra.mxu0 0.0
        %1281 = vmatpush.msra.mxu0 0.0
        %1282 = vmatpush.msra.mxu0 0.0
        %1283 = vmatpush.msra.mxu0 0.0
        %1284 = vmatpush.msra.mxu0 0.0
        %1285 = vmatpush.msra.mxu0 0.0
        %1286 = vmatpush.msra.mxu0 0.0
        %1287 = vmatpush.msra.mxu0 0.0
        %1288 = vmatpush.msra.mxu0 0.0
        %1289 = vmatpush.msra.mxu0 0.0
        %1290 = vmatpush.msra.mxu0 0.0
        %1291 = vmatpush.msra.mxu0 0.0
        %1292 = vmatpush.msra.mxu0 0.0
        %1293 = vmatpush.msra.mxu0 0.0
        %1294 = vmatpush.msra.mxu0 0.0
        %1295 = vmatpush.msra.mxu0 %v1258
        %1296 = vmatmul.f32.gmra.mxu0 %v1254
        %v1297 = vpop.f32.mrf.mxu0
        %v1298 = vadd.f32 %v1251, %v1297
        %1299 = vdwg.mxu0
        %s1300 = scalar_lea.vmem %s2, 32
        %v1301 = vld [vmem:[%s1300] sm:$0xf]
        %1302 = vrot.lane.b32.xlu0 %v1192, 118
        %v1303 = vpop.permute.xlu0 %1302
        %1304 = vrot.lane.b32.xlu0 %v1193, 118
        %v1305 = vpop.permute.xlu0 %1304
        %vm1306 = vcmask 965632
        %v1307 = vsel %vm1306, %v1303, %v1305
        %v1309 = vsel %vm341, %v1301, 0
        %v1311 = vsel %vm345, %v1307, 0
        %v1313 = vsel %vm345, %v1305, 0
        %1315 = vmatpush.msra.mxu0 0.0
        %1316 = vmatpush.msra.mxu0 0.0
        %1317 = vmatpush.msra.mxu0 0.0
        %1318 = vmatpush.msra.mxu0 0.0
        %1319 = vmatpush.msra.mxu0 0.0
        %1320 = vmatpush.msra.mxu0 0.0
        %1321 = vmatpush.msra.mxu0 0.0
        %1322 = vmatpush.msra.mxu0 0.0
        %1323 = vmatpush.msra.mxu0 0.0
        %1324 = vmatpush.msra.mxu0 0.0
        %1325 = vmatpush.msra.mxu0 0.0
        %1326 = vmatpush.msra.mxu0 0.0
        %1327 = vmatpush.msra.mxu0 0.0
        %1328 = vmatpush.msra.mxu0 0.0
        %1329 = vmatpush.msra.mxu0 0.0
        %1330 = vmatpush.msra.mxu0 %v1311
        %1331 = vmatmul.f32.gmra.mxu0 %v1309
        %v1332 = vpop.f32.mrf.mxu0
        %v1333 = vadd.f32 0.0, %v1332
        %1334 = vdwg.mxu0
        %1335 = vmatpush.msra.mxu0 0.0
        %1336 = vmatpush.msra.mxu0 0.0
        %1337 = vmatpush.msra.mxu0 0.0
        %1338 = vmatpush.msra.mxu0 0.0
        %1339 = vmatpush.msra.mxu0 0.0
        %1340 = vmatpush.msra.mxu0 0.0
        %1341 = vmatpush.msra.mxu0 0.0
        %1342 = vmatpush.msra.mxu0 0.0
        %1343 = vmatpush.msra.mxu0 0.0
        %1344 = vmatpush.msra.mxu0 0.0
        %1345 = vmatpush.msra.mxu0 0.0
        %1346 = vmatpush.msra.mxu0 0.0
        %1347 = vmatpush.msra.mxu0 0.0
        %1348 = vmatpush.msra.mxu0 0.0
        %1349 = vmatpush.msra.mxu0 0.0
        %1350 = vmatpush.msra.mxu0 %v1313
        %1351 = vmatmul.f32.gmra.mxu0 %v1309
        %v1352 = vpop.f32.mrf.mxu0
        %v1353 = vadd.f32 0.0, %v1352
        %1354 = vdwg.mxu0
        %v1355 = vadd.f32 %v1278, %v1333
        %v1356 = vadd.f32 %v1298, %v1353
        %s1357 = scalar_lea.vmem %s3, 8
        %v1358 = vld [vmem:[%s1357] sm:$0xf]
        %1360 = vset.pattern.permute.xlu0 0
        %1361 = vperm.xlu0 %1360, %v1358
        %v1362 = vpop.permute.xlu0 %1361
        %v1364 = vadd.f32 %v1355, %v1362
        %v1365 = vadd.f32 %v1356, %v1362
        %s1366 = ssub.s32 %s508, 1
        %v1367 = vstv %s1366
        %v1368 = vadd.s32 %v1367, %v511
        %v1369 = vadd.s32 %v1367, %v512
        %vm1370 = vcmp.ge.s32.totalorder %v1368, 0
        %vm1371 = vcmp.ge.s32.totalorder %v1369, 0
        %vm1372 = vcmp.lt.s32.totalorder %v1368, 256
        %vm1373 = vcmp.lt.s32.totalorder %v1369, 256
        %vm1374 = vmand %vm1370, %vm1372
        %vm1375 = vmand %vm1371, %vm1373
        %v1376 = vsel %vm1374, 1, 0
        %v1377 = vsel %vm1375, 1, 0
        %vm1378 = vcmp.eq.s32.totalorder %v1376, 1
        %vm1379 = vcmp.eq.s32.totalorder %v1377, 1
        %v1380 = vsel %vm1378, %v1364, 0.0
        %v1381 = vsel %vm1379, %v1365, 0.0
        %vm1382 = vcmp.ge.f32.partialorder %v1380, 0.0
        %vm1383 = vcmp.ge.f32.partialorder %v1381, 0.0
        %v1384 = vmul.f32 %v1380, 0.1
        %v1385 = vmul.f32 %v1381, 0.1
        %v1386 = vsel %vm1382, %v1380, %v1384
        %v1387 = vsel %vm1383, %v1381, %v1385
        %s1388 = scalar_lea.vmem %s5, 8
        %v1389 = vld [vmem:[%s1388] sm:$0xf]
        %1391 = vset.pattern.permute.xlu0 0
        %1392 = vperm.xlu0 %1391, %v1389
        %v1393 = vpop.permute.xlu0 %1392
        %v1395 = vadd.f32 %v1186, %v1393
        %v1396 = vadd.f32 %v1187, %v1393
        %s1397 = scalar_lea.vmem %s4, 24
        %v1398 = vld [vmem:[%s1397] sm:$0xf]
        %v1400 = vsel %vm341, %v1398, 0
        %v1403 = vsel %vm345, %v1386, 0
        %1405 = vmatpush.msra.mxu0 0.0
        %1406 = vmatpush.msra.mxu0 0.0
        %1407 = vmatpush.msra.mxu0 0.0
        %1408 = vmatpush.msra.mxu0 0.0
        %1409 = vmatpush.msra.mxu0 0.0
        %1410 = vmatpush.msra.mxu0 0.0
        %1411 = vmatpush.msra.mxu0 0.0
        %1412 = vmatpush.msra.mxu0 0.0
        %1413 = vmatpush.msra.mxu0 0.0
        %1414 = vmatpush.msra.mxu0 0.0
        %1415 = vmatpush.msra.mxu0 0.0
        %1416 = vmatpush.msra.mxu0 0.0
        %1417 = vmatpush.msra.mxu0 0.0
        %1418 = vmatpush.msra.mxu0 0.0
        %1419 = vmatpush.msra.mxu0 0.0
        %1420 = vmatpush.msra.mxu0 %v1403
        %1421 = vmatmul.f32.gmra.mxu0 %v1400
        %v1422 = vpop.f32.mrf.mxu0
        %v1423 = vadd.f32 0.0, %v1422
        %1424 = vdwg.mxu0
        %1426 = vrot.lane.b32.xlu0 %v1423, 6
        %v1427 = vpop.permute.xlu0 %1426
        %v1429 = vadd.f32 %v1395, %v1427
        %v1430 = vadd.f32 %v1396, %v1427
        %s1431 = scalar_lea.vmem %s4, 28
        %v1432 = vld [vmem:[%s1431] sm:$0xf]
        %1434 = vrot.lane.b32.xlu0 %v1386, 127
        %v1435 = vpop.permute.xlu0 %1434
        %1436 = vrot.lane.b32.xlu0 %v1387, 127
        %v1437 = vpop.permute.xlu0 %1436
        %v1438 = vsel %vm339, %v1435, %v1437
        %v1440 = vsel %vm341, %v1432, 0
        %v1442 = vsel %vm345, %v1438, 0
        %1444 = vmatpush.msra.mxu0 0.0
        %1445 = vmatpush.msra.mxu0 0.0
        %1446 = vmatpush.msra.mxu0 0.0
        %1447 = vmatpush.msra.mxu0 0.0
        %1448 = vmatpush.msra.mxu0 0.0
        %1449 = vmatpush.msra.mxu0 0.0
        %1450 = vmatpush.msra.mxu0 0.0
        %1451 = vmatpush.msra.mxu0 0.0
        %1452 = vmatpush.msra.mxu0 0.0
        %1453 = vmatpush.msra.mxu0 0.0
        %1454 = vmatpush.msra.mxu0 0.0
        %1455 = vmatpush.msra.mxu0 0.0
        %1456 = vmatpush.msra.mxu0 0.0
        %1457 = vmatpush.msra.mxu0 0.0
        %1458 = vmatpush.msra.mxu0 0.0
        %1459 = vmatpush.msra.mxu0 %v1442
        %1460 = vmatmul.f32.gmra.mxu0 %v1440
        %v1461 = vpop.f32.mrf.mxu0
        %v1462 = vadd.f32 0.0, %v1461
        %1463 = vdwg.mxu0
        %1465 = vrot.lane.b32.xlu0 %v1462, 6
        %v1466 = vpop.permute.xlu0 %1465
        %v1468 = vadd.f32 %v1429, %v1466
        %v1469 = vadd.f32 %v1430, %v1466
        %s1470 = scalar_lea.vmem %s4, 32
        %v1471 = vld [vmem:[%s1470] sm:$0xf]
        %1472 = vrot.lane.b32.xlu0 %v1386, 126
        %v1473 = vpop.permute.xlu0 %1472
        %1474 = vrot.lane.b32.xlu0 %v1387, 126
        %v1475 = vpop.permute.xlu0 %1474
        %v1476 = vsel %vm449, %v1473, %v1475
        %v1478 = vsel %vm341, %v1471, 0
        %v1480 = vsel %vm345, %v1476, 0
        %1482 = vmatpush.msra.mxu0 0.0
        %1483 = vmatpush.msra.mxu0 0.0
        %1484 = vmatpush.msra.mxu0 0.0
        %1485 = vmatpush.msra.mxu0 0.0
        %1486 = vmatpush.msra.mxu0 0.0
        %1487 = vmatpush.msra.mxu0 0.0
        %1488 = vmatpush.msra.mxu0 0.0
        %1489 = vmatpush.msra.mxu0 0.0
        %1490 = vmatpush.msra.mxu0 0.0
        %1491 = vmatpush.msra.mxu0 0.0
        %1492 = vmatpush.msra.mxu0 0.0
        %1493 = vmatpush.msra.mxu0 0.0
        %1494 = vmatpush.msra.mxu0 0.0
        %1495 = vmatpush.msra.mxu0 0.0
        %1496 = vmatpush.msra.mxu0 0.0
        %1497 = vmatpush.msra.mxu0 %v1480
        %1498 = vmatmul.f32.gmra.mxu0 %v1478
        %v1499 = vpop.f32.mrf.mxu0
        %v1500 = vadd.f32 0.0, %v1499
        %1501 = vdwg.mxu0
        %1503 = vrot.lane.b32.xlu0 %v1500, 6
        %v1504 = vpop.permute.xlu0 %1503
        %v1506 = vadd.f32 %v1468, %v1504
        %v1507 = vadd.f32 %v1469, %v1504
        %v1508 = vstv %s508
        %v1509 = vadd.s32 %v1508, %v511
        %vm1510 = vcmp.ge.s32.totalorder %v1509, 0
        %vm1511 = vcmp.lt.s32.totalorder %v1509, 256
        %vm1512 = vmand %vm1510, %vm1511
        %v1513 = vsel %vm1512, 1, 0
        %vm1514 = vcmp.eq.s32.totalorder %v1513, 1
        %1517 = vrot.lane.b32.xlu0 %v1506, 122
        %v1518 = vpop.permute.xlu0 %1517
        %1519 = vrot.lane.b32.xlu0 %v1507, 122
        %v1520 = vpop.permute.xlu0 %1519
        %v1521 = vsel %vm879, %v1518, %v1520
        %v1523 = vsel %vm1514, %v1521, 0.0
        %1524 = vst [vmem:[%s289] sm:$0xf] %v1523
        %s1525 = sand.u32 %s182, 1
        %s1526 = scalar_lea.sflag [#allocation4], %s1525
        %s1527 = sand.u32 %s182, 1
        %s1528 = smul.addr %s1527, 4
        %s1529 = scalar_lea.vmem [#allocation3], %s1528
        // Predicated region
        $region45: #{resblock_forward.1} parent=43 // pred_check
          %p1530 = pneg %p192
        $region46: #{resblock_forward.1} parent=43 // pred_check_branch
          %1532 = sbr.rel (%p1530) target = $region48
        $region47: #{resblock_forward.1} parent=43 // pred_region
          %1534 = vsyncadd %s1526, 0
          %s1535 = smul.addr %s24, 2
          %s1536 = sadd.s32 %s25, %s1535
          %s1537 = smul.addr %s1536, 4
          %s1538 = scalar_lea.hbm %s6, %s1537
          %s1540 = sshll.u32 %s1529, 4
          %s1541 = int_to_ptr.vmem [resolvable:$true] %s1540
          %s1542 = sshll.u32 %s1538, 4
          %s1543 = int_to_ptr.hbm [resolvable:$true] %s1542
          %1545 = dma.vmem_to_hbm [thread:$0]  %s1541, 64, %s1543, %s1526
        $region48: #{resblock_forward.1} parent=43 // pred_fallthru
          _
      $region44: #{resblock_forward.1} parent=5 // pred_fallthru
        _
      %p1546 = scmp.le.s32.totalorder 2, %s15
      // Predicated region
      $region49: #{resblock_forward.1} parent=5 // pred_check
        %p1547 = pneg %p1546
      $region50: #{resblock_forward.1} parent=5 // pred_check_branch
        %1549 = sbr.rel (%p1547) target = $region52
      $region51: #{resblock_forward.1} parent=5 // pred_region
        %s1550 = ssub.s32 %s15, 2
        // Predicated region
        $region53: #{resblock_forward.1} parent=51 // pred_check
          %p1551 = pneg %p198
        $region54: #{resblock_forward.1} parent=51 // pred_check_branch
          %1553 = sbr.rel (%p1551) target = $region56
        $region55: #{resblock_forward.1} parent=51 // pred_region
          %s1554 = sand.u32 %s183, 1
          %s1555 = scalar_lea.sflag [#allocation4], %s1554
          %s1556 = sand.u32 %s183, 1
          %s1557 = smul.addr %s1556, 4
          %s1558 = scalar_lea.vmem [#allocation3], %s1557
          %1560 = dma.done %s1555, 64
        $region56: #{resblock_forward.1} parent=51 // pred_fallthru
          _
      $region52: #{resblock_forward.1} parent=5 // pred_fallthru
        _
    $region6: #{resblock_forward.1} parent=1 // loop_footer
      %s19 = sadd.s32 1, %s15
    $region7: #{resblock_forward.1} parent=1 // loop_footer_branch
      %14 = sbr.rel target = $region3
    $region8: #{resblock_forward.1} parent=1 // loop_exit
      _
    %1561 = vsyncpa [#allocation4], 1
    %s1562 = scalar_lea.sflag [#allocation4], 1
    %1563 = vsyncpa %s1562, 1

</llo_original>
